<compile_context>
chip_gen: v5e
topology: v5e:2x2
jax: 0.10.0
libtpu: 0.0.40
codegen_flags: <defaults>
</compile_context>

<pallas_src>
import jax
import jax.numpy as jnp
from jax.experimental import pallas as pl
from jax.experimental.pallas import tpu as pltpu

# ---- config (mirrors gans/cgan config names) --------------------------------
N_CLASSES = 10
N_C = 1
IMAGE_SIZE = 16
HIDDEN = 512
D_FLAT = N_C * IMAGE_SIZE * IMAGE_SIZE          # 256  (already 2 x 128 lanes)
D_IN = N_CLASSES + D_FLAT                       # 266  (PyTorch layer-1 fan-in)
OUT_PAD = 128                                   # final layer has 1 output; pad to one lane reg


def _leaky_relu(x, slope=0.2):
    return jnp.where(x > 0, x, slope * x)


def disc_mlp_kernel(x_ref, b1_ref, w1_ref, w2_ref, b2_ref,
                    w3_ref, b3_ref, w4_ref, b4_ref, o_ref):
    """Whole 4-layer MLP for one batch tile.

    x_ref  : (TB, 256)   bf16   flattened image tile
    b1_ref : (TB, 512)   f32    per-sample folded bias (emb @ W1_emb + b1)[label]
    w*_ref : bf16 weights (resident across tiles), b2/b3/b4 f32 biases
    o_ref  : (TB, 128)   f32    (only column 0 is the real validity score)
    """
    # layer 1: image part of the matmul; embedding part arrives pre-folded in b1
    h = jnp.dot(x_ref[...], w1_ref[...], preferred_element_type=jnp.float32)
    h = _leaky_relu(h + b1_ref[...])                                   # (TB, 512) f32

    # layer 2 (+ Dropout(0.4) -> identity in eval mode)
    h = jnp.dot(h.astype(jnp.bfloat16), w2_ref[...],
                preferred_element_type=jnp.float32) + b2_ref[...]
    h = _leaky_relu(h)

    # layer 3 (+ Dropout(0.4) -> identity in eval mode)
    h = jnp.dot(h.astype(jnp.bfloat16), w3_ref[...],
                preferred_element_type=jnp.float32) + b3_ref[...]
    h = _leaky_relu(h)

    # layer 4 (output padded to 128 lanes; padded columns are zero)
    out = jnp.dot(h.astype(jnp.bfloat16), w4_ref[...],
                  preferred_element_type=jnp.float32) + b4_ref[...]
    o_ref[...] = out.astype(o_ref.dtype)


def _choose_tb(batch):
    """Batch tile: multiples of 256 for big batches (fills v6e/v7x MXU),
    otherwise the whole (sublane-rounded) batch as a single tile."""
    if batch >= 512:
        return 512
    if batch >= 256:
        return 256
    return max(8, ((batch + 7) // 8) * 8)


@jax.jit
def discriminator_forward(img, labels, kparams):
    """img: (B, N_C, IMAGE_SIZE, IMAGE_SIZE) f32, labels: (B,) int32."""
    B = img.shape[0]

    # ---- glue (plain JAX): flatten + fold label embedding into layer-1 bias --
    flat = img.reshape(B, -1).astype(jnp.bfloat16)              # (B, 256)
    bias1 = jnp.take(kparams["b1_table"], labels, axis=0)       # (B, 512) f32

    TB = _choose_tb(B)
    n_tiles = pl.cdiv(B, TB)
    B_pad = n_tiles * TB
    if B_pad != B:
        flat = jnp.pad(flat, ((0, B_pad - B), (0, 0)))
        bias1 = jnp.pad(bias1, ((0, B_pad - B), (0, 0)))

    def row_spec(cols):                       # batch-tiled operands
        return pl.BlockSpec((TB, cols), lambda i: (i, 0))

    def const_spec(shape):                    # weights/biases resident across tiles
        return pl.BlockSpec(shape, lambda i: (0, 0))

    flops = 2 * B_pad * (D_FLAT * HIDDEN + HIDDEN * HIDDEN * 2 + HIDDEN * OUT_PAD)
    bytes_accessed = (
        B_pad * D_FLAT * 2                                   # x tile stream (bf16)
        + B_pad * HIDDEN * 4                                 # folded bias stream (f32)
        + (D_FLAT * HIDDEN + 2 * HIDDEN * HIDDEN + HIDDEN * OUT_PAD) * 2   # bf16 weights
        + (2 * HIDDEN + OUT_PAD) * 4                         # f32 biases
        + B_pad * OUT_PAD * 4                                # output
    )

    out_padded = pl.pallas_call(
        disc_mlp_kernel,
        out_shape=jax.ShapeDtypeStruct((B_pad, OUT_PAD), jnp.float32),
        grid=(B_pad // TB,),
        in_specs=[
            row_spec(D_FLAT),                       # flat image tile
            row_spec(HIDDEN),                       # per-sample folded layer-1 bias
            const_spec((D_FLAT, HIDDEN)),           # w1 (image rows only, bf16)
            const_spec((HIDDEN, HIDDEN)),           # w2 bf16
            const_spec((1, HIDDEN)),                # b2 f32
            const_spec((HIDDEN, HIDDEN)),           # w3 bf16
            const_spec((1, HIDDEN)),                # b3 f32
            const_spec((HIDDEN, OUT_PAD)),          # w4 bf16 (padded to 128 cols)
            const_spec((1, OUT_PAD)),               # b4 f32 (padded)
        ],
        out_specs=row_spec(OUT_PAD),
        compiler_params=pltpu.CompilerParams(
            dimension_semantics=("parallel",)),     # shards batch tiles across TCs on v7x
        cost_estimate=pl.CostEstimate(
            flops=flops, transcendentals=0, bytes_accessed=bytes_accessed),
    )(
        flat, bias1,
        kparams["w1"], kparams["w2"], kparams["b2"],
        kparams["w3"], kparams["b3"], kparams["w4"], kparams["b4"],
    )
    return out_padded[:B, :1]                                   # (B, 1) validity


def init_params(key):
    """Deterministic f32 master parameters matching the PyTorch module shapes."""
    ks = jax.random.split(key, 9)
    scale = 0.02

    def rnd(k, shape):
        return scale * jax.random.normal(k, shape, dtype=jnp.float32)

    return {
        "emb": rnd(ks[0], (N_CLASSES, N_CLASSES)),
        "w1": rnd(ks[1], (D_IN, HIDDEN)), "b1": rnd(ks[2], (1, HIDDEN)),
        "w2": rnd(ks[3], (HIDDEN, HIDDEN)), "b2": rnd(ks[4], (1, HIDDEN)),
        "w3": rnd(ks[5], (HIDDEN, HIDDEN)), "b3": rnd(ks[6], (1, HIDDEN)),
        "w4": rnd(ks[7], (HIDDEN, 1)), "b4": rnd(ks[8], (1, 1)),
    }


def prepare_kernel_params(params):
    """One-time prep: bf16 weights, output padding, folded per-class layer-1 bias."""
    w1 = params["w1"]                                        # (266, 512) f32
    w1_img = w1[:D_FLAT].astype(jnp.bfloat16)                # (256, 512) bf16
    w1_emb = w1[D_FLAT:]                                     # (10, 512)  f32
    # Exact refactoring: x @ W1 = flat @ W1_img + emb[label] @ W1_emb
    b1_table = params["emb"] @ w1_emb + params["b1"]         # (N_CLASSES, 512) f32

    w4_pad = jnp.zeros((HIDDEN, OUT_PAD), jnp.float32).at[:, :1].set(params["w4"])
    b4_pad = jnp.zeros((1, OUT_PAD), jnp.float32).at[:, :1].set(params["b4"])

    return {
        "b1_table": b1_table,
        "w1": w1_img,
        "w2": params["w2"].astype(jnp.bfloat16), "b2": params["b2"],
        "w3": params["w3"].astype(jnp.bfloat16), "b3": params["b3"],
        "w4": w4_pad.astype(jnp.bfloat16),       "b4": b4_pad,
    }


def reference_forward(img, labels, params):
    """Pure-JAX f32 reference with the original concat path (PyTorch semantics)."""
    B = img.shape[0]
    emb = jnp.take(params["emb"], labels, axis=0)
    x = jnp.concatenate([img.reshape(B, -1), emb], axis=-1)
    h = x @ params["w1"] + params["b1"]
    h = jnp.where(h > 0, h, 0.2 * h)
    h = h @ params["w2"] + params["b2"]
    h = jnp.where(h > 0, h, 0.2 * h)
    h = h @ params["w3"] + params["b3"]
    h = jnp.where(h > 0, h, 0.2 * h)
    return h @ params["w4"] + params["b4"]


if __name__ == "__main__":
    key = jax.random.PRNGKey(0)
    k_img, k_lab, k_par = jax.random.split(key, 3)

    B = 8
    img = jax.random.normal(k_img, (B, N_C, IMAGE_SIZE, IMAGE_SIZE), dtype=jnp.float32)
    labels = jax.random.randint(k_lab, (B,), 0, N_CLASSES, dtype=jnp.int32)

    params = init_params(k_par)
    kparams = prepare_kernel_params(params)

    out = discriminator_forward(img, labels, kparams)
    out = jax.block_until_ready(out)

    ref = reference_forward(img, labels, params)
    assert out.shape == (B, 1), out.shape
    # bf16 weights/activations vs f32 reference -> loosened tolerance (f32 accumulation kept).
    assert jnp.allclose(out, ref, atol=5e-3, rtol=5e-2), (out, ref)

    print("KERNEL_OK")
</pallas_src>

<mosaic_0001>
module attributes {stable_mosaic.version = 11 : i64} {
  func.func @disc_mlp_kernel(%arg0: i32, %arg1: memref<8x256xbf16, #tpu.memory_space<vmem>>, %arg2: memref<8x512xf32, #tpu.memory_space<vmem>>, %arg3: memref<256x512xbf16, #tpu.memory_space<vmem>>, %arg4: memref<512x512xbf16, #tpu.memory_space<vmem>>, %arg5: memref<1x512xf32, #tpu.memory_space<vmem>>, %arg6: memref<512x512xbf16, #tpu.memory_space<vmem>>, %arg7: memref<1x512xf32, #tpu.memory_space<vmem>>, %arg8: memref<512x128xbf16, #tpu.memory_space<vmem>>, %arg9: memref<1x128xf32, #tpu.memory_space<vmem>>, %arg10: memref<8x128xf32, #tpu.memory_space<vmem>>) attributes {dimension_semantics = [#tpu.dimension_semantics<parallel>], iteration_bounds = array<i64: 1>, scalar_prefetch = 0 : i64, scratch_operands = 0 : i64, tpu.core_type = #tpu.core_type<tc>, window_params = [{transform_indices = @transform_0, window_bounds = array<i64: 8, 256>}, {transform_indices = @transform_1, window_bounds = array<i64: 8, 512>}, {pipeline_mode = #tpu.pipeline_mode<synchronous>, transform_indices = @transform_2, window_bounds = array<i64: 256, 512>}, {pipeline_mode = #tpu.pipeline_mode<synchronous>, transform_indices = @transform_3, window_bounds = array<i64: 512, 512>}, {pipeline_mode = #tpu.pipeline_mode<synchronous>, transform_indices = @transform_4, window_bounds = array<i64: 1, 512>}, {pipeline_mode = #tpu.pipeline_mode<synchronous>, transform_indices = @transform_5, window_bounds = array<i64: 512, 512>}, {pipeline_mode = #tpu.pipeline_mode<synchronous>, transform_indices = @transform_6, window_bounds = array<i64: 1, 512>}, {pipeline_mode = #tpu.pipeline_mode<synchronous>, transform_indices = @transform_7, window_bounds = array<i64: 512, 128>}, {pipeline_mode = #tpu.pipeline_mode<synchronous>, transform_indices = @transform_8, window_bounds = array<i64: 1, 128>}, {transform_indices = @transform_9, window_bounds = array<i64: 8, 128>}]} {
    %c0 = arith.constant 0 : index
    %c0_0 = arith.constant 0 : index
    %0 = vector.load %arg1[%c0, %c0_0] : memref<8x256xbf16, #tpu.memory_space<vmem>>, vector<8x256xbf16>
    %c0_1 = arith.constant 0 : index
    %c0_2 = arith.constant 0 : index
    %1 = vector.load %arg3[%c0_1, %c0_2] : memref<256x512xbf16, #tpu.memory_space<vmem>>, vector<256x512xbf16>
    %cst = arith.constant dense<0.000000e+00> : vector<8x512xf32>
    %2 = tpu.matmul %0, %1, %cst {dimension_numbers = #tpu.dot_dimension_numbers<[1], [0], [0], [1], [0, 0, 1, 1], [], []>} : vector<8x256xbf16>, vector<256x512xbf16>, vector<8x512xf32> -> vector<8x512xf32>
    %c0_3 = arith.constant 0 : index
    %c0_4 = arith.constant 0 : index
    %3 = vector.load %arg2[%c0_3, %c0_4] : memref<8x512xf32, #tpu.memory_space<vmem>>, vector<8x512xf32>
    %4 = arith.addf %2, %3 : vector<8x512xf32>
    %cst_5 = arith.constant 0.000000e+00 : f32
    %5 = vector.broadcast %cst_5 : f32 to vector<8x512xf32>
    %6 = arith.cmpf ogt, %4, %5 : vector<8x512xf32>
    %cst_6 = arith.constant 2.000000e-01 : f32
    %7 = vector.broadcast %cst_6 : f32 to vector<8x512xf32>
    %8 = arith.mulf %7, %4 : vector<8x512xf32>
    %9 = arith.select %6, %4, %8 : vector<8x512xi1>, vector<8x512xf32>
    %10 = arith.truncf %9 : vector<8x512xf32> to vector<8x512xbf16>
    %c0_7 = arith.constant 0 : index
    %c0_8 = arith.constant 0 : index
    %11 = vector.load %arg4[%c0_7, %c0_8] : memref<512x512xbf16, #tpu.memory_space<vmem>>, vector<512x512xbf16>
    %cst_9 = arith.constant dense<0.000000e+00> : vector<8x512xf32>
    %12 = tpu.matmul %10, %11, %cst_9 {dimension_numbers = #tpu.dot_dimension_numbers<[1], [0], [0], [1], [0, 0, 1, 1], [], []>} : vector<8x512xbf16>, vector<512x512xbf16>, vector<8x512xf32> -> vector<8x512xf32>
    %c0_10 = arith.constant 0 : index
    %c0_11 = arith.constant 0 : index
    %13 = vector.load %arg5[%c0_10, %c0_11] : memref<1x512xf32, #tpu.memory_space<vmem>>, vector<1x512xf32>
    %14 = vector.broadcast %13 : vector<1x512xf32> to vector<8x512xf32>
    %15 = arith.addf %12, %14 : vector<8x512xf32>
    %cst_12 = arith.constant 0.000000e+00 : f32
    %16 = vector.broadcast %cst_12 : f32 to vector<8x512xf32>
    %17 = arith.cmpf ogt, %15, %16 : vector<8x512xf32>
    %cst_13 = arith.constant 2.000000e-01 : f32
    %18 = vector.broadcast %cst_13 : f32 to vector<8x512xf32>
    %19 = arith.mulf %18, %15 : vector<8x512xf32>
    %20 = arith.select %17, %15, %19 : vector<8x512xi1>, vector<8x512xf32>
    %21 = arith.truncf %20 : vector<8x512xf32> to vector<8x512xbf16>
    %c0_14 = arith.constant 0 : index
    %c0_15 = arith.constant 0 : index
    %22 = vector.load %arg6[%c0_14, %c0_15] : memref<512x512xbf16, #tpu.memory_space<vmem>>, vector<512x512xbf16>
    %cst_16 = arith.constant dense<0.000000e+00> : vector<8x512xf32>
    %23 = tpu.matmul %21, %22, %cst_16 {dimension_numbers = #tpu.dot_dimension_numbers<[1], [0], [0], [1], [0, 0, 1, 1], [], []>} : vector<8x512xbf16>, vector<512x512xbf16>, vector<8x512xf32> -> vector<8x512xf32>
    %c0_17 = arith.constant 0 : index
    %c0_18 = arith.constant 0 : index
    %24 = vector.load %arg7[%c0_17, %c0_18] : memref<1x512xf32, #tpu.memory_space<vmem>>, vector<1x512xf32>
    %25 = vector.broadcast %24 : vector<1x512xf32> to vector<8x512xf32>
    %26 = arith.addf %23, %25 : vector<8x512xf32>
    %cst_19 = arith.constant 0.000000e+00 : f32
    %27 = vector.broadcast %cst_19 : f32 to vector<8x512xf32>
    %28 = arith.cmpf ogt, %26, %27 : vector<8x512xf32>
    %cst_20 = arith.constant 2.000000e-01 : f32
    %29 = vector.broadcast %cst_20 : f32 to vector<8x512xf32>
    %30 = arith.mulf %29, %26 : vector<8x512xf32>
    %31 = arith.select %28, %26, %30 : vector<8x512xi1>, vector<8x512xf32>
    %32 = arith.truncf %31 : vector<8x512xf32> to vector<8x512xbf16>
    %c0_21 = arith.constant 0 : index
    %c0_22 = arith.constant 0 : index
    %33 = vector.load %arg8[%c0_21, %c0_22] : memref<512x128xbf16, #tpu.memory_space<vmem>>, vector<512x128xbf16>
    %cst_23 = arith.constant dense<0.000000e+00> : vector<8x128xf32>
    %34 = tpu.matmul %32, %33, %cst_23 {dimension_numbers = #tpu.dot_dimension_numbers<[1], [0], [0], [1], [0, 0, 1, 1], [], []>} : vector<8x512xbf16>, vector<512x128xbf16>, vector<8x128xf32> -> vector<8x128xf32>
    %c0_24 = arith.constant 0 : index
    %c0_25 = arith.constant 0 : index
    %35 = vector.load %arg9[%c0_24, %c0_25] : memref<1x128xf32, #tpu.memory_space<vmem>>, vector<1x128xf32>
    %36 = vector.broadcast %35 : vector<1x128xf32> to vector<8x128xf32>
    %37 = arith.addf %34, %36 : vector<8x128xf32>
    %c0_26 = arith.constant 0 : index
    %c0_27 = arith.constant 0 : index
    %38 = vector.load %arg10[%c0_26, %c0_27] : memref<8x128xf32, #tpu.memory_space<vmem>>, vector<8x128xf32>
    tpu.vector_store %arg10[%c0_26, %c0_27], %37 {strides = array<i32>} : memref<8x128xf32, #tpu.memory_space<vmem>>, vector<8x128xf32>,
    return
  }
  func.func @transform_0(%arg0: i32) -> (i32, i32) {
    %c0_i32 = arith.constant 0 : i32
    %c0_i32_0 = arith.constant 0 : i32
    return %arg0, %c0_i32 : i32, i32
  }
  func.func @transform_1(%arg0: i32) -> (i32, i32) {
    %c0_i32 = arith.constant 0 : i32
    %c0_i32_0 = arith.constant 0 : i32
    return %arg0, %c0_i32 : i32, i32
  }
  func.func @transform_2(%arg0: i32) -> (i32, i32) {
    %c0_i32 = arith.constant 0 : i32
    %c0_i32_0 = arith.constant 0 : i32
    %c0_i32_1 = arith.constant 0 : i32
    return %c0_i32, %c0_i32_0 : i32, i32
  }
  func.func @transform_3(%arg0: i32) -> (i32, i32) {
    %c0_i32 = arith.constant 0 : i32
    %c0_i32_0 = arith.constant 0 : i32
    %c0_i32_1 = arith.constant 0 : i32
    return %c0_i32, %c0_i32_0 : i32, i32
  }
  func.func @transform_4(%arg0: i32) -> (i32, i32) {
    %c0_i32 = arith.constant 0 : i32
    %c0_i32_0 = arith.constant 0 : i32
    %c0_i32_1 = arith.constant 0 : i32
    return %c0_i32, %c0_i32_0 : i32, i32
  }
  func.func @transform_5(%arg0: i32) -> (i32, i32) {
    %c0_i32 = arith.constant 0 : i32
    %c0_i32_0 = arith.constant 0 : i32
    %c0_i32_1 = arith.constant 0 : i32
    return %c0_i32, %c0_i32_0 : i32, i32
  }
  func.func @transform_6(%arg0: i32) -> (i32, i32) {
    %c0_i32 = arith.constant 0 : i32
    %c0_i32_0 = arith.constant 0 : i32
    %c0_i32_1 = arith.constant 0 : i32
    return %c0_i32, %c0_i32_0 : i32, i32
  }
  func.func @transform_7(%arg0: i32) -> (i32, i32) {
    %c0_i32 = arith.constant 0 : i32
    %c0_i32_0 = arith.constant 0 : i32
    %c0_i32_1 = arith.constant 0 : i32
    return %c0_i32, %c0_i32_0 : i32, i32
  }
  func.func @transform_8(%arg0: i32) -> (i32, i32) {
    %c0_i32 = arith.constant 0 : i32
    %c0_i32_0 = arith.constant 0 : i32
    %c0_i32_1 = arith.constant 0 : i32
    return %c0_i32, %c0_i32_0 : i32, i32
  }
  func.func @transform_9(%arg0: i32) -> (i32, i32) {
    %c0_i32 = arith.constant 0 : i32
    %c0_i32_0 = arith.constant 0 : i32
    return %arg0, %c0_i32 : i32, i32
  }
}

</mosaic_0001>

<llo_original>
// kernel: discriminator_forward.1
$region0: #{discriminator_forward.1}
  #allocation0 [shape = 'u32[]', space=smem, size = 0x4, offset = 0x4, fixed_abs, tag = 'smem constant byte address 0x4 - core index']
  #allocation1 [shape = 'u32[72,128]{1,0:T(1,128)}', space=vmem, size = 0x9000, scoped, tag = 'internal scratch']
  %s0 = inlined_call_operand.vmem [shape: bf16[8,256], index: 0, kind: input, shape index: {}]
  %s1 = inlined_call_operand.vmem [shape: f32[8,512], index: 1, kind: input, shape index: {}]
  %s2 = inlined_call_operand.vmem [shape: bf16[256,512], index: 2, kind: input, shape index: {}]
  %s3 = inlined_call_operand.hbm [shape: bf16[512,512], index: 3, kind: input, shape index: {}]
  %s4 = inlined_call_operand.vmem [shape: f32[1,512], index: 4, kind: input, shape index: {}]
  %s5 = inlined_call_operand.hbm [shape: bf16[512,512], index: 5, kind: input, shape index: {}]
  %s6 = inlined_call_operand.vmem [shape: f32[1,512], index: 6, kind: input, shape index: {}]
  %s7 = inlined_call_operand.hbm [shape: bf16[512,128], index: 7, kind: input, shape index: {}]
  %s8 = inlined_call_operand.vmem [shape: f32[1,128], index: 8, kind: input, shape index: {}]
  %s9 = inlined_call_operand.vmem [shape: f32[8,128], index: 9, kind: output, shape index: {}]
  %s10 = sld [smem:[#allocation0]]
  $region58: #{discriminator_forward.1} parent=0
    _
  %s12 = ssub.s32 1, %s10
  %s13 = scalar_select 0, %s12, %s10
  $region1: #{discriminator_forward.1} parent=0
    #allocation2 [shape = 'u8[524288]{0}', space=vmem, size = 0x80000, scoped, tag = 'input window, operand 3, single buffered']
    #allocation3 [shape = 's32[1]{0}', space=sflag, size = 0x4, scoped, tag = 'scoped memory for discriminator_forward.1']
    #allocation4 [shape = 'u8[524288]{0}', space=vmem, size = 0x80000, scoped, tag = 'input window, operand 5, single buffered']
    #allocation5 [shape = 's32[1]{0}', space=sflag, size = 0x4, scoped, tag = 'scoped memory for discriminator_forward.1']
    #allocation6 [shape = 'u8[131072]{0}', space=vmem, size = 0x20000, scoped, tag = 'input window, operand 7, single buffered']
    %14 = vsyncpa [#allocation3], 0
    %15 = vsyncpa [#allocation5], 0
    // Predicated region
    $region2: #{discriminator_forward.1} parent=1 // pred_check
      _
    $region3: #{discriminator_forward.1} parent=1 // pred_check_branch
      %17 = sbr.rel (0) target = $region5
    $region4: #{discriminator_forward.1} parent=1 // pred_region
      _
    $region5: #{discriminator_forward.1} parent=1 // pred_fallthru
      _
    // Predicated region
    $region6: #{discriminator_forward.1} parent=1 // pred_check
      _
    $region7: #{discriminator_forward.1} parent=1 // pred_check_branch
      %19 = sbr.rel (0) target = $region9
    $region8: #{discriminator_forward.1} parent=1 // pred_region
      _
    $region9: #{discriminator_forward.1} parent=1 // pred_fallthru
      _
    // Predicated region
    $region10: #{discriminator_forward.1} parent=1 // pred_check
      _
    $region11: #{discriminator_forward.1} parent=1 // pred_check_branch
      %21 = sbr.rel (0) target = $region13
    $region12: #{discriminator_forward.1} parent=1 // pred_region
      _
    $region13: #{discriminator_forward.1} parent=1 // pred_fallthru
      _
    // Predicated region
    $region14: #{discriminator_forward.1} parent=1 // pred_check
      _
    $region15: #{discriminator_forward.1} parent=1 // pred_check_branch
      %23 = sbr.rel (0) target = $region17
    $region16: #{discriminator_forward.1} parent=1 // pred_region
      %25 = vsyncadd [#allocation3], 0
      %s26 = sshll.u32 %s3, 4
      %s27 = int_to_ptr.hbm [resolvable:$true] %s26
      %s28 = sshll.u32 [#allocation2], 4
      %s29 = int_to_ptr.vmem [resolvable:$true] %s28
      %34 = dma.hbm_to_vmem [thread:$0]  %s27, 16384, %s29, [#allocation3], 256, 256, 16
    $region17: #{discriminator_forward.1} parent=1 // pred_fallthru
      _
    // Predicated region
    $region18: #{discriminator_forward.1} parent=1 // pred_check
      _
    $region19: #{discriminator_forward.1} parent=1 // pred_check_branch
      %36 = sbr.rel (0) target = $region21
    $region20: #{discriminator_forward.1} parent=1 // pred_region
      _
    $region21: #{discriminator_forward.1} parent=1 // pred_fallthru
      _
    // Predicated region
    $region22: #{discriminator_forward.1} parent=1 // pred_check
      _
    $region23: #{discriminator_forward.1} parent=1 // pred_check_branch
      %38 = sbr.rel (0) target = $region25
    $region24: #{discriminator_forward.1} parent=1 // pred_region
      %40 = vsyncadd [#allocation5], 0
      %s41 = sshll.u32 %s5, 4
      %s42 = int_to_ptr.hbm [resolvable:$true] %s41
      %s43 = sshll.u32 [#allocation4], 4
      %s44 = int_to_ptr.vmem [resolvable:$true] %s43
      %49 = dma.hbm_to_vmem [thread:$0]  %s42, 16384, %s44, [#allocation5], 256, 256, 16
    $region25: #{discriminator_forward.1} parent=1 // pred_fallthru
      _
    // Predicated region
    $region26: #{discriminator_forward.1} parent=1 // pred_check
      _
    $region27: #{discriminator_forward.1} parent=1 // pred_check_branch
      %51 = sbr.rel (0) target = $region29
    $region28: #{discriminator_forward.1} parent=1 // pred_region
      _
    $region29: #{discriminator_forward.1} parent=1 // pred_fallthru
      _
    // Predicated region
    $region30: #{discriminator_forward.1} parent=1 // pred_check
      _
    $region31: #{discriminator_forward.1} parent=1 // pred_check_branch
      %53 = sbr.rel (0) target = $region33
    $region32: #{discriminator_forward.1} parent=1 // pred_region
      %55 = vsyncadd [#allocation5], 0
      %s56 = sshll.u32 %s7, 4
      %s57 = int_to_ptr.hbm [resolvable:$true] %s56
      %s58 = sshll.u32 [#allocation6], 4
      %s59 = int_to_ptr.vmem [resolvable:$true] %s58
      %64 = dma.hbm_to_vmem [thread:$0]  %s57, 4096, %s59, [#allocation5], 64, 64, 4
    $region33: #{discriminator_forward.1} parent=1 // pred_fallthru
      _
    // Predicated region
    $region34: #{discriminator_forward.1} parent=1 // pred_check
      _
    $region35: #{discriminator_forward.1} parent=1 // pred_check_branch
      %66 = sbr.rel (0) target = $region37
    $region36: #{discriminator_forward.1} parent=1 // pred_region
      _
    $region37: #{discriminator_forward.1} parent=1 // pred_fallthru
      _
    // Predicated region
    $region38: #{discriminator_forward.1} parent=1 // pred_check
      _
    $region39: #{discriminator_forward.1} parent=1 // pred_check_branch
      %68 = sbr.rel (0) target = $region41
    $region40: #{discriminator_forward.1} parent=1 // pred_region
      %70 = dma.done [#allocation3], 16384
    $region41: #{discriminator_forward.1} parent=1 // pred_fallthru
      _
    // Predicated region
    $region42: #{discriminator_forward.1} parent=1 // pred_check
      _
    $region43: #{discriminator_forward.1} parent=1 // pred_check_branch
      %72 = sbr.rel (0) target = $region45
    $region44: #{discriminator_forward.1} parent=1 // pred_region
      %74 = dma.done [#allocation5], 16384
    $region45: #{discriminator_forward.1} parent=1 // pred_fallthru
      _
    // Predicated region
    $region46: #{discriminator_forward.1} parent=1 // pred_check
      _
    $region47: #{discriminator_forward.1} parent=1 // pred_check_branch
      %76 = sbr.rel (0) target = $region49
    $region48: #{discriminator_forward.1} parent=1 // pred_region
      %78 = dma.done [#allocation5], 4096
    $region49: #{discriminator_forward.1} parent=1 // pred_fallthru
      _
    %v79 = vld [vmem:[%s0] sm:$0xff]
    %v80 = vld [vmem:[%s2] sm:$0xff]
    %v81 = vld [vmem:[%s2 + $0x8] sm:$0xff]
    %v82 = vld [vmem:[%s2 + $0x10] sm:$0xff]
    %v83 = vld [vmem:[%s2 + $0x18] sm:$0xff]
    %v84 = vld [vmem:[%s2 + $0x20] sm:$0xff]
    %v85 = vld [vmem:[%s2 + $0x28] sm:$0xff]
    %v86 = vld [vmem:[%s2 + $0x30] sm:$0xff]
    %v87 = vld [vmem:[%s2 + $0x38] sm:$0xff]
    %v88 = vld [vmem:[%s2 + $0x40] sm:$0xff]
    %v89 = vld [vmem:[%s2 + $0x48] sm:$0xff]
    %v90 = vld [vmem:[%s2 + $0x50] sm:$0xff]
    %v91 = vld [vmem:[%s2 + $0x58] sm:$0xff]
    %v92 = vld [vmem:[%s2 + $0x60] sm:$0xff]
    %v93 = vld [vmem:[%s2 + $0x68] sm:$0xff]
    %v94 = vld [vmem:[%s2 + $0x70] sm:$0xff]
    %v95 = vld [vmem:[%s2 + $0x78] sm:$0xff]
    %v96 = vld [vmem:[%s2 + $0x80] sm:$0xff]
    %v97 = vld [vmem:[%s2 + $0x88] sm:$0xff]
    %v98 = vld [vmem:[%s2 + $0x90] sm:$0xff]
    %v99 = vld [vmem:[%s2 + $0x98] sm:$0xff]
    %v100 = vld [vmem:[%s2 + $0xa0] sm:$0xff]
    %v101 = vld [vmem:[%s2 + $0xa8] sm:$0xff]
    %v102 = vld [vmem:[%s2 + $0xb0] sm:$0xff]
    %v103 = vld [vmem:[%s2 + $0xb8] sm:$0xff]
    %v104 = vld [vmem:[%s2 + $0xc0] sm:$0xff]
    %v105 = vld [vmem:[%s2 + $0xc8] sm:$0xff]
    %v106 = vld [vmem:[%s2 + $0xd0] sm:$0xff]
    %v107 = vld [vmem:[%s2 + $0xd8] sm:$0xff]
    %v108 = vld [vmem:[%s2 + $0xe0] sm:$0xff]
    %v109 = vld [vmem:[%s2 + $0xe8] sm:$0xff]
    %v110 = vld [vmem:[%s2 + $0xf0] sm:$0xff]
    %v111 = vld [vmem:[%s2 + $0xf8] sm:$0xff]
    %v112 = vld [vmem:[%s2 + $0x100] sm:$0xff]
    %v113 = vld [vmem:[%s2 + $0x108] sm:$0xff]
    %v114 = vld [vmem:[%s2 + $0x110] sm:$0xff]
    %v115 = vld [vmem:[%s2 + $0x118] sm:$0xff]
    %v116 = vld [vmem:[%s2 + $0x120] sm:$0xff]
    %v117 = vld [vmem:[%s2 + $0x128] sm:$0xff]
    %v118 = vld [vmem:[%s2 + $0x130] sm:$0xff]
    %v119 = vld [vmem:[%s2 + $0x138] sm:$0xff]
    %v120 = vld [vmem:[%s2 + $0x140] sm:$0xff]
    %v121 = vld [vmem:[%s2 + $0x148] sm:$0xff]
    %v122 = vld [vmem:[%s2 + $0x150] sm:$0xff]
    %v123 = vld [vmem:[%s2 + $0x158] sm:$0xff]
    %v124 = vld [vmem:[%s2 + $0x160] sm:$0xff]
    %v125 = vld [vmem:[%s2 + $0x168] sm:$0xff]
    %v126 = vld [vmem:[%s2 + $0x170] sm:$0xff]
    %v127 = vld [vmem:[%s2 + $0x178] sm:$0xff]
    %v128 = vld [vmem:[%s2 + $0x180] sm:$0xff]
    %v129 = vld [vmem:[%s2 + $0x188] sm:$0xff]
    %v130 = vld [vmem:[%s2 + $0x190] sm:$0xff]
    %v131 = vld [vmem:[%s2 + $0x198] sm:$0xff]
    %v132 = vld [vmem:[%s2 + $0x1a0] sm:$0xff]
    %v133 = vld [vmem:[%s2 + $0x1a8] sm:$0xff]
    %v134 = vld [vmem:[%s2 + $0x1b0] sm:$0xff]
    %v135 = vld [vmem:[%s2 + $0x1b8] sm:$0xff]
    %v136 = vld [vmem:[%s2 + $0x1c0] sm:$0xff]
    %v137 = vld [vmem:[%s2 + $0x1c8] sm:$0xff]
    %v138 = vld [vmem:[%s2 + $0x1d0] sm:$0xff]
    %v139 = vld [vmem:[%s2 + $0x1d8] sm:$0xff]
    %v140 = vld [vmem:[%s2 + $0x1e0] sm:$0xff]
    %v141 = vld [vmem:[%s2 + $0x1e8] sm:$0xff]
    %v142 = vld [vmem:[%s2 + $0x1f0] sm:$0xff]
    %v143 = vld [vmem:[%s2 + $0x1f8] sm:$0xff]
    %v144 = vld [vmem:[%s1] sm:$0xff]
    %v145 = vld [vmem:[%s1 + $0x8] sm:$0xff]
    %v146 = vld [vmem:[%s1 + $0x10] sm:$0xff]
    %v147 = vld [vmem:[%s1 + $0x18] sm:$0xff]
    %v149 = vunpack.c.l.b16 %v79
    %v150 = vunpack.c.h.b16 %v79
    %v151 = vpack.c.b16 %v149, %v149
    %v152 = vpack.c.b16 %v150, %v150
    %v219 = vunpack.c.l.b16 %v80
    %v220 = vunpack.c.h.b16 %v80
    %v221 = vunpack.c.l.b16 %v81
    %v222 = vunpack.c.h.b16 %v81
    %v223 = vunpack.c.l.b16 %v82
    %v224 = vunpack.c.h.b16 %v82
    %v225 = vunpack.c.l.b16 %v83
    %v226 = vunpack.c.h.b16 %v83
    %v227 = vunpack.c.l.b16 %v84
    %v228 = vunpack.c.h.b16 %v84
    %v229 = vunpack.c.l.b16 %v85
    %v230 = vunpack.c.h.b16 %v85
    %v231 = vunpack.c.l.b16 %v86
    %v232 = vunpack.c.h.b16 %v86
    %v233 = vunpack.c.l.b16 %v87
    %v234 = vunpack.c.h.b16 %v87
    %v235 = vunpack.c.l.b16 %v88
    %v236 = vunpack.c.h.b16 %v88
    %v237 = vunpack.c.l.b16 %v89
    %v238 = vunpack.c.h.b16 %v89
    %v239 = vunpack.c.l.b16 %v90
    %v240 = vunpack.c.h.b16 %v90
    %v241 = vunpack.c.l.b16 %v91
    %v242 = vunpack.c.h.b16 %v91
    %v243 = vunpack.c.l.b16 %v92
    %v244 = vunpack.c.h.b16 %v92
    %v245 = vunpack.c.l.b16 %v93
    %v246 = vunpack.c.h.b16 %v93
    %v247 = vunpack.c.l.b16 %v94
    %v248 = vunpack.c.h.b16 %v94
    %v249 = vunpack.c.l.b16 %v95
    %v250 = vunpack.c.h.b16 %v95
    %v251 = vunpack.c.l.b16 %v96
    %v252 = vunpack.c.h.b16 %v96
    %v253 = vunpack.c.l.b16 %v97
    %v254 = vunpack.c.h.b16 %v97
    %v255 = vunpack.c.l.b16 %v98
    %v256 = vunpack.c.h.b16 %v98
    %v257 = vunpack.c.l.b16 %v99
    %v258 = vunpack.c.h.b16 %v99
    %v259 = vunpack.c.l.b16 %v100
    %v260 = vunpack.c.h.b16 %v100
    %v261 = vunpack.c.l.b16 %v101
    %v262 = vunpack.c.h.b16 %v101
    %v263 = vunpack.c.l.b16 %v102
    %v264 = vunpack.c.h.b16 %v102
    %v265 = vunpack.c.l.b16 %v103
    %v266 = vunpack.c.h.b16 %v103
    %v267 = vunpack.c.l.b16 %v104
    %v268 = vunpack.c.h.b16 %v104
    %v269 = vunpack.c.l.b16 %v105
    %v270 = vunpack.c.h.b16 %v105
    %v271 = vunpack.c.l.b16 %v106
    %v272 = vunpack.c.h.b16 %v106
    %v273 = vunpack.c.l.b16 %v107
    %v274 = vunpack.c.h.b16 %v107
    %v275 = vunpack.c.l.b16 %v108
    %v276 = vunpack.c.h.b16 %v108
    %v277 = vunpack.c.l.b16 %v109
    %v278 = vunpack.c.h.b16 %v109
    %v279 = vunpack.c.l.b16 %v110
    %v280 = vunpack.c.h.b16 %v110
    %v281 = vunpack.c.l.b16 %v111
    %v282 = vunpack.c.h.b16 %v111
    %v283 = vunpack.c.l.b16 %v112
    %v284 = vunpack.c.h.b16 %v112
    %v285 = vunpack.c.l.b16 %v113
    %v286 = vunpack.c.h.b16 %v113
    %v287 = vunpack.c.l.b16 %v114
    %v288 = vunpack.c.h.b16 %v114
    %v289 = vunpack.c.l.b16 %v115
    %v290 = vunpack.c.h.b16 %v115
    %v291 = vunpack.c.l.b16 %v116
    %v292 = vunpack.c.h.b16 %v116
    %v293 = vunpack.c.l.b16 %v117
    %v294 = vunpack.c.h.b16 %v117
    %v295 = vunpack.c.l.b16 %v118
    %v296 = vunpack.c.h.b16 %v118
    %v297 = vunpack.c.l.b16 %v119
    %v298 = vunpack.c.h.b16 %v119
    %v299 = vunpack.c.l.b16 %v120
    %v300 = vunpack.c.h.b16 %v120
    %v301 = vunpack.c.l.b16 %v121
    %v302 = vunpack.c.h.b16 %v121
    %v303 = vunpack.c.l.b16 %v122
    %v304 = vunpack.c.h.b16 %v122
    %v305 = vunpack.c.l.b16 %v123
    %v306 = vunpack.c.h.b16 %v123
    %v307 = vunpack.c.l.b16 %v124
    %v308 = vunpack.c.h.b16 %v124
    %v309 = vunpack.c.l.b16 %v125
    %v310 = vunpack.c.h.b16 %v125
    %v311 = vunpack.c.l.b16 %v126
    %v312 = vunpack.c.h.b16 %v126
    %v313 = vunpack.c.l.b16 %v127
    %v314 = vunpack.c.h.b16 %v127
    %v315 = vunpack.c.l.b16 %v128
    %v316 = vunpack.c.h.b16 %v128
    %v317 = vunpack.c.l.b16 %v129
    %v318 = vunpack.c.h.b16 %v129
    %v319 = vunpack.c.l.b16 %v130
    %v320 = vunpack.c.h.b16 %v130
    %v321 = vunpack.c.l.b16 %v131
    %v322 = vunpack.c.h.b16 %v131
    %v323 = vunpack.c.l.b16 %v132
    %v324 = vunpack.c.h.b16 %v132
    %v325 = vunpack.c.l.b16 %v133
    %v326 = vunpack.c.h.b16 %v133
    %v327 = vunpack.c.l.b16 %v134
    %v328 = vunpack.c.h.b16 %v134
    %v329 = vunpack.c.l.b16 %v135
    %v330 = vunpack.c.h.b16 %v135
    %v331 = vunpack.c.l.b16 %v136
    %v332 = vunpack.c.h.b16 %v136
    %v333 = vunpack.c.l.b16 %v137
    %v334 = vunpack.c.h.b16 %v137
    %v335 = vunpack.c.l.b16 %v138
    %v336 = vunpack.c.h.b16 %v138
    %v337 = vunpack.c.l.b16 %v139
    %v338 = vunpack.c.h.b16 %v139
    %v339 = vunpack.c.l.b16 %v140
    %v340 = vunpack.c.h.b16 %v140
    %v341 = vunpack.c.l.b16 %v141
    %v342 = vunpack.c.h.b16 %v141
    %v343 = vunpack.c.l.b16 %v142
    %v344 = vunpack.c.h.b16 %v142
    %v345 = vunpack.c.l.b16 %v143
    %v346 = vunpack.c.h.b16 %v143
    %v347 = vpack.c.b16 %v223, %v219
    %v348 = vpack.c.b16 %v224, %v220
    %v349 = vpack.c.b16 %v225, %v221
    %v350 = vpack.c.b16 %v226, %v222
    %v351 = vpack.c.b16 %v231, %v227
    %v352 = vpack.c.b16 %v232, %v228
    %v353 = vpack.c.b16 %v233, %v229
    %v354 = vpack.c.b16 %v234, %v230
    %v355 = vpack.c.b16 %v239, %v235
    %v356 = vpack.c.b16 %v240, %v236
    %v357 = vpack.c.b16 %v241, %v237
    %v358 = vpack.c.b16 %v242, %v238
    %v359 = vpack.c.b16 %v247, %v243
    %v360 = vpack.c.b16 %v248, %v244
    %v361 = vpack.c.b16 %v249, %v245
    %v362 = vpack.c.b16 %v250, %v246
    %v363 = vpack.c.b16 %v255, %v251
    %v364 = vpack.c.b16 %v256, %v252
    %v365 = vpack.c.b16 %v257, %v253
    %v366 = vpack.c.b16 %v258, %v254
    %v367 = vpack.c.b16 %v263, %v259
    %v368 = vpack.c.b16 %v264, %v260
    %v369 = vpack.c.b16 %v265, %v261
    %v370 = vpack.c.b16 %v266, %v262
    %v371 = vpack.c.b16 %v271, %v267
    %v372 = vpack.c.b16 %v272, %v268
    %v373 = vpack.c.b16 %v273, %v269
    %v374 = vpack.c.b16 %v274, %v270
    %v375 = vpack.c.b16 %v279, %v275
    %v376 = vpack.c.b16 %v280, %v276
    %v377 = vpack.c.b16 %v281, %v277
    %v378 = vpack.c.b16 %v282, %v278
    %v379 = vpack.c.b16 %v287, %v283
    %v380 = vpack.c.b16 %v288, %v284
    %v381 = vpack.c.b16 %v289, %v285
    %v382 = vpack.c.b16 %v290, %v286
    %v383 = vpack.c.b16 %v295, %v291
    %v384 = vpack.c.b16 %v296, %v292
    %v385 = vpack.c.b16 %v297, %v293
    %v386 = vpack.c.b16 %v298, %v294
    %v387 = vpack.c.b16 %v303, %v299
    %v388 = vpack.c.b16 %v304, %v300
    %v389 = vpack.c.b16 %v305, %v301
    %v390 = vpack.c.b16 %v306, %v302
    %v391 = vpack.c.b16 %v311, %v307
    %v392 = vpack.c.b16 %v312, %v308
    %v393 = vpack.c.b16 %v313, %v309
    %v394 = vpack.c.b16 %v314, %v310
    %v395 = vpack.c.b16 %v319, %v315
    %v396 = vpack.c.b16 %v320, %v316
    %v397 = vpack.c.b16 %v321, %v317
    %v398 = vpack.c.b16 %v322, %v318
    %v399 = vpack.c.b16 %v327, %v323
    %v400 = vpack.c.b16 %v328, %v324
    %v401 = vpack.c.b16 %v329, %v325
    %v402 = vpack.c.b16 %v330, %v326
    %v403 = vpack.c.b16 %v335, %v331
    %v404 = vpack.c.b16 %v336, %v332
    %v405 = vpack.c.b16 %v337, %v333
    %v406 = vpack.c.b16 %v338, %v334
    %v407 = vpack.c.b16 %v343, %v339
    %v408 = vpack.c.b16 %v344, %v340
    %v409 = vpack.c.b16 %v345, %v341
    %v410 = vpack.c.b16 %v346, %v342
    %475 = vmatpush.bf16.msra.mxu0 %v375
    %476 = vmatpush.bf16.msra.mxu0 %v371
    %477 = vmatpush.bf16.msra.mxu0 %v367
    %478 = vmatpush.bf16.msra.mxu0 %v363
    %479 = vmatpush.bf16.msra.mxu0 %v359
    %480 = vmatpush.bf16.msra.mxu0 %v355
    %481 = vmatpush.bf16.msra.mxu0 %v351
    %482 = vmatpush.bf16.msra.mxu0 %v347
    %483 = vmatmul.bf16.gmra.mxu0 %v151
    %v484 = vpop.f32.mrf.mxu0
    %v485 = vadd.f32 %v144, %v484
    %v486 = vpop.f32.mrf.mxu0
    %487 = vdwg.mxu0
    %488 = vmatpush.bf16.msra.mxu0 %v407
    %489 = vmatpush.bf16.msra.mxu0 %v403
    %490 = vmatpush.bf16.msra.mxu0 %v399
    %491 = vmatpush.bf16.msra.mxu0 %v395
    %492 = vmatpush.bf16.msra.mxu0 %v391
    %493 = vmatpush.bf16.msra.mxu0 %v387
    %494 = vmatpush.bf16.msra.mxu0 %v383
    %495 = vmatpush.bf16.msra.mxu0 %v379
    %496 = vmatmul.bf16.gmra.mxu0 %v152
    %v497 = vpop.f32.mrf.mxu0
    %v498 = vadd.f32 %v485, %v497
    %v499 = vpop.f32.mrf.mxu0
    %500 = vdwg.mxu0
    %501 = vmatpush.bf16.msra.mxu0 %v376
    %502 = vmatpush.bf16.msra.mxu0 %v372
    %503 = vmatpush.bf16.msra.mxu0 %v368
    %504 = vmatpush.bf16.msra.mxu0 %v364
    %505 = vmatpush.bf16.msra.mxu0 %v360
    %506 = vmatpush.bf16.msra.mxu0 %v356
    %507 = vmatpush.bf16.msra.mxu0 %v352
    %508 = vmatpush.bf16.msra.mxu0 %v348
    %509 = vmatmul.bf16.gmra.mxu0 %v151
    %v510 = vpop.f32.mrf.mxu0
    %v511 = vadd.f32 %v145, %v510
    %v512 = vpop.f32.mrf.mxu0
    %513 = vdwg.mxu0
    %514 = vmatpush.bf16.msra.mxu0 %v408
    %515 = vmatpush.bf16.msra.mxu0 %v404
    %516 = vmatpush.bf16.msra.mxu0 %v400
    %517 = vmatpush.bf16.msra.mxu0 %v396
    %518 = vmatpush.bf16.msra.mxu0 %v392
    %519 = vmatpush.bf16.msra.mxu0 %v388
    %520 = vmatpush.bf16.msra.mxu0 %v384
    %521 = vmatpush.bf16.msra.mxu0 %v380
    %522 = vmatmul.bf16.gmra.mxu0 %v152
    %v523 = vpop.f32.mrf.mxu0
    %v524 = vadd.f32 %v511, %v523
    %v525 = vpop.f32.mrf.mxu0
    %526 = vdwg.mxu0
    %527 = vmatpush.bf16.msra.mxu0 %v377
    %528 = vmatpush.bf16.msra.mxu0 %v373
    %529 = vmatpush.bf16.msra.mxu0 %v369
    %530 = vmatpush.bf16.msra.mxu0 %v365
    %531 = vmatpush.bf16.msra.mxu0 %v361
    %532 = vmatpush.bf16.msra.mxu0 %v357
    %533 = vmatpush.bf16.msra.mxu0 %v353
    %534 = vmatpush.bf16.msra.mxu0 %v349
    %535 = vmatmul.bf16.gmra.mxu0 %v151
    %v536 = vpop.f32.mrf.mxu0
    %v537 = vadd.f32 %v146, %v536
    %v538 = vpop.f32.mrf.mxu0
    %539 = vdwg.mxu0
    %540 = vmatpush.bf16.msra.mxu0 %v409
    %541 = vmatpush.bf16.msra.mxu0 %v405
    %542 = vmatpush.bf16.msra.mxu0 %v401
    %543 = vmatpush.bf16.msra.mxu0 %v397
    %544 = vmatpush.bf16.msra.mxu0 %v393
    %545 = vmatpush.bf16.msra.mxu0 %v389
    %546 = vmatpush.bf16.msra.mxu0 %v385
    %547 = vmatpush.bf16.msra.mxu0 %v381
    %548 = vmatmul.bf16.gmra.mxu0 %v152
    %v549 = vpop.f32.mrf.mxu0
    %v550 = vadd.f32 %v537, %v549
    %v551 = vpop.f32.mrf.mxu0
    %552 = vdwg.mxu0
    %553 = vmatpush.bf16.msra.mxu0 %v378
    %554 = vmatpush.bf16.msra.mxu0 %v374
    %555 = vmatpush.bf16.msra.mxu0 %v370
    %556 = vmatpush.bf16.msra.mxu0 %v366
    %557 = vmatpush.bf16.msra.mxu0 %v362
    %558 = vmatpush.bf16.msra.mxu0 %v358
    %559 = vmatpush.bf16.msra.mxu0 %v354
    %560 = vmatpush.bf16.msra.mxu0 %v350
    %561 = vmatmul.bf16.gmra.mxu0 %v151
    %v562 = vpop.f32.mrf.mxu0
    %v563 = vadd.f32 %v147, %v562
    %v564 = vpop.f32.mrf.mxu0
    %565 = vdwg.mxu0
    %566 = vmatpush.bf16.msra.mxu0 %v410
    %567 = vmatpush.bf16.msra.mxu0 %v406
    %568 = vmatpush.bf16.msra.mxu0 %v402
    %569 = vmatpush.bf16.msra.mxu0 %v398
    %570 = vmatpush.bf16.msra.mxu0 %v394
    %571 = vmatpush.bf16.msra.mxu0 %v390
    %572 = vmatpush.bf16.msra.mxu0 %v386
    %573 = vmatpush.bf16.msra.mxu0 %v382
    %574 = vmatmul.bf16.gmra.mxu0 %v152
    %v575 = vpop.f32.mrf.mxu0
    %v576 = vadd.f32 %v563, %v575
    %v577 = vpop.f32.mrf.mxu0
    %578 = vdwg.mxu0
    %vm579 = vcmp.gt.f32.partialorder %v498, 0.0
    %vm580 = vcmp.gt.f32.partialorder %v524, 0.0
    %vm581 = vcmp.gt.f32.partialorder %v550, 0.0
    %vm582 = vcmp.gt.f32.partialorder %v576, 0.0
    %v583 = vmul.f32 %v498, 0.2
    %v584 = vmul.f32 %v524, 0.2
    %v585 = vmul.f32 %v550, 0.2
    %v586 = vmul.f32 %v576, 0.2
    %v587 = vsel %vm579, %v498, %v583
    %v588 = vsel %vm580, %v524, %v584
    %v589 = vsel %vm581, %v550, %v585
    %v590 = vsel %vm582, %v576, %v586
    %v591 = vpack.c.bf16 %v587, %v587
    %v592 = vpack.c.bf16 %v588, %v588
    %v593 = vpack.c.bf16 %v589, %v589
    %v594 = vpack.c.bf16 %v590, %v590
    %v595 = vld [vmem:[#allocation2] sm:$0xff]
    %v596 = vld [vmem:[#allocation2 + $0x8] sm:$0xff]
    %v597 = vld [vmem:[#allocation2 + $0x10] sm:$0xff]
    %v598 = vld [vmem:[#allocation2 + $0x18] sm:$0xff]
    %v599 = vld [vmem:[#allocation2 + $0x20] sm:$0xff]
    %v600 = vld [vmem:[#allocation2 + $0x28] sm:$0xff]
    %v601 = vld [vmem:[#allocation2 + $0x30] sm:$0xff]
    %v602 = vld [vmem:[#allocation2 + $0x38] sm:$0xff]
    %v603 = vld [vmem:[#allocation2 + $0x40] sm:$0xff]
    %v604 = vld [vmem:[#allocation2 + $0x48] sm:$0xff]
    %v605 = vld [vmem:[#allocation2 + $0x50] sm:$0xff]
    %v606 = vld [vmem:[#allocation2 + $0x58] sm:$0xff]
    %v607 = vld [vmem:[#allocation2 + $0x60] sm:$0xff]
    %v608 = vld [vmem:[#allocation2 + $0x68] sm:$0xff]
    %v609 = vld [vmem:[#allocation2 + $0x70] sm:$0xff]
    %v610 = vld [vmem:[#allocation2 + $0x78] sm:$0xff]
    %v611 = vld [vmem:[#allocation2 + $0x80] sm:$0xff]
    %v612 = vld [vmem:[#allocation2 + $0x88] sm:$0xff]
    %v613 = vld [vmem:[#allocation2 + $0x90] sm:$0xff]
    %v614 = vld [vmem:[#allocation2 + $0x98] sm:$0xff]
    %v615 = vld [vmem:[#allocation2 + $0xa0] sm:$0xff]
    %v616 = vld [vmem:[#allocation2 + $0xa8] sm:$0xff]
    %v617 = vld [vmem:[#allocation2 + $0xb0] sm:$0xff]
    %v618 = vld [vmem:[#allocation2 + $0xb8] sm:$0xff]
    %v619 = vld [vmem:[#allocation2 + $0xc0] sm:$0xff]
    %v620 = vld [vmem:[#allocation2 + $0xc8] sm:$0xff]
    %v621 = vld [vmem:[#allocation2 + $0xd0] sm:$0xff]
    %v622 = vld [vmem:[#allocation2 + $0xd8] sm:$0xff]
    %v623 = vld [vmem:[#allocation2 + $0xe0] sm:$0xff]
    %v624 = vld [vmem:[#allocation2 + $0xe8] sm:$0xff]
    %v625 = vld [vmem:[#allocation2 + $0xf0] sm:$0xff]
    %v626 = vld [vmem:[#allocation2 + $0xf8] sm:$0xff]
    %v627 = vld [vmem:[#allocation2 + $0x100] sm:$0xff]
    %v628 = vld [vmem:[#allocation2 + $0x108] sm:$0xff]
    %v629 = vld [vmem:[#allocation2 + $0x110] sm:$0xff]
    %v630 = vld [vmem:[#allocation2 + $0x118] sm:$0xff]
    %v631 = vld [vmem:[#allocation2 + $0x120] sm:$0xff]
    %v632 = vld [vmem:[#allocation2 + $0x128] sm:$0xff]
    %v633 = vld [vmem:[#allocation2 + $0x130] sm:$0xff]
    %v634 = vld [vmem:[#allocation2 + $0x138] sm:$0xff]
    %v635 = vld [vmem:[#allocation2 + $0x140] sm:$0xff]
    %v636 = vld [vmem:[#allocation2 + $0x148] sm:$0xff]
    %v637 = vld [vmem:[#allocation2 + $0x150] sm:$0xff]
    %v638 = vld [vmem:[#allocation2 + $0x158] sm:$0xff]
    %v639 = vld [vmem:[#allocation2 + $0x160] sm:$0xff]
    %v640 = vld [vmem:[#allocation2 + $0x168] sm:$0xff]
    %v641 = vld [vmem:[#allocation2 + $0x170] sm:$0xff]
    %v642 = vld [vmem:[#allocation2 + $0x178] sm:$0xff]
    %v643 = vld [vmem:[#allocation2 + $0x180] sm:$0xff]
    %v644 = vld [vmem:[#allocation2 + $0x188] sm:$0xff]
    %v645 = vld [vmem:[#allocation2 + $0x190] sm:$0xff]
    %v646 = vld [vmem:[#allocation2 + $0x198] sm:$0xff]
    %v647 = vld [vmem:[#allocation2 + $0x1a0] sm:$0xff]
    %v648 = vld [vmem:[#allocation2 + $0x1a8] sm:$0xff]
    %v649 = vld [vmem:[#allocation2 + $0x1b0] sm:$0xff]
    %v650 = vld [vmem:[#allocation2 + $0x1b8] sm:$0xff]
    %v651 = vld [vmem:[#allocation2 + $0x1c0] sm:$0xff]
    %v652 = vld [vmem:[#allocation2 + $0x1c8] sm:$0xff]
    %v653 = vld [vmem:[#allocation2 + $0x1d0] sm:$0xff]
    %v654 = vld [vmem:[#allocation2 + $0x1d8] sm:$0xff]
    %v655 = vld [vmem:[#allocation2 + $0x1e0] sm:$0xff]
    %v656 = vld [vmem:[#allocation2 + $0x1e8] sm:$0xff]
    %v657 = vld [vmem:[#allocation2 + $0x1f0] sm:$0xff]
    %v658 = vld [vmem:[#allocation2 + $0x1f8] sm:$0xff]
    %v659 = vld [vmem:[#allocation2 + $0x200] sm:$0xff]
    %v660 = vld [vmem:[#allocation2 + $0x208] sm:$0xff]
    %v661 = vld [vmem:[#allocation2 + $0x210] sm:$0xff]
    %v662 = vld [vmem:[#allocation2 + $0x218] sm:$0xff]
    %v663 = vld [vmem:[#allocation2 + $0x220] sm:$0xff]
    %v664 = vld [vmem:[#allocation2 + $0x228] sm:$0xff]
    %v665 = vld [vmem:[#allocation2 + $0x230] sm:$0xff]
    %v666 = vld [vmem:[#allocation2 + $0x238] sm:$0xff]
    %v667 = vld [vmem:[#allocation2 + $0x240] sm:$0xff]
    %v668 = vld [vmem:[#allocation2 + $0x248] sm:$0xff]
    %v669 = vld [vmem:[#allocation2 + $0x250] sm:$0xff]
    %v670 = vld [vmem:[#allocation2 + $0x258] sm:$0xff]
    %v671 = vld [vmem:[#allocation2 + $0x260] sm:$0xff]
    %v672 = vld [vmem:[#allocation2 + $0x268] sm:$0xff]
    %v673 = vld [vmem:[#allocation2 + $0x270] sm:$0xff]
    %v674 = vld [vmem:[#allocation2 + $0x278] sm:$0xff]
    %v675 = vld [vmem:[#allocation2 + $0x280] sm:$0xff]
    %v676 = vld [vmem:[#allocation2 + $0x288] sm:$0xff]
    %v677 = vld [vmem:[#allocation2 + $0x290] sm:$0xff]
    %v678 = vld [vmem:[#allocation2 + $0x298] sm:$0xff]
    %v679 = vld [vmem:[#allocation2 + $0x2a0] sm:$0xff]
    %v680 = vld [vmem:[#allocation2 + $0x2a8] sm:$0xff]
    %v681 = vld [vmem:[#allocation2 + $0x2b0] sm:$0xff]
    %v682 = vld [vmem:[#allocation2 + $0x2b8] sm:$0xff]
    %v683 = vld [vmem:[#allocation2 + $0x2c0] sm:$0xff]
    %v684 = vld [vmem:[#allocation2 + $0x2c8] sm:$0xff]
    %v685 = vld [vmem:[#allocation2 + $0x2d0] sm:$0xff]
    %v686 = vld [vmem:[#allocation2 + $0x2d8] sm:$0xff]
    %v687 = vld [vmem:[#allocation2 + $0x2e0] sm:$0xff]
    %v688 = vld [vmem:[#allocation2 + $0x2e8] sm:$0xff]
    %v689 = vld [vmem:[#allocation2 + $0x2f0] sm:$0xff]
    %v690 = vld [vmem:[#allocation2 + $0x2f8] sm:$0xff]
    %v691 = vld [vmem:[#allocation2 + $0x300] sm:$0xff]
    %v692 = vld [vmem:[#allocation2 + $0x308] sm:$0xff]
    %v693 = vld [vmem:[#allocation2 + $0x310] sm:$0xff]
    %v694 = vld [vmem:[#allocation2 + $0x318] sm:$0xff]
    %v695 = vld [vmem:[#allocation2 + $0x320] sm:$0xff]
    %v696 = vld [vmem:[#allocation2 + $0x328] sm:$0xff]
    %v697 = vld [vmem:[#allocation2 + $0x330] sm:$0xff]
    %v698 = vld [vmem:[#allocation2 + $0x338] sm:$0xff]
    %v699 = vld [vmem:[#allocation2 + $0x340] sm:$0xff]
    %v700 = vld [vmem:[#allocation2 + $0x348] sm:$0xff]
    %v701 = vld [vmem:[#allocation2 + $0x350] sm:$0xff]
    %v702 = vld [vmem:[#allocation2 + $0x358] sm:$0xff]
    %v703 = vld [vmem:[#allocation2 + $0x360] sm:$0xff]
    %v704 = vld [vmem:[#allocation2 + $0x368] sm:$0xff]
    %v705 = vld [vmem:[#allocation2 + $0x370] sm:$0xff]
    %v706 = vld [vmem:[#allocation2 + $0x378] sm:$0xff]
    %v707 = vld [vmem:[#allocation2 + $0x380] sm:$0xff]
    %v708 = vld [vmem:[#allocation2 + $0x388] sm:$0xff]
    %v709 = vld [vmem:[#allocation2 + $0x390] sm:$0xff]
    %v710 = vld [vmem:[#allocation2 + $0x398] sm:$0xff]
    %v711 = vld [vmem:[#allocation2 + $0x3a0] sm:$0xff]
    %v712 = vld [vmem:[#allocation2 + $0x3a8] sm:$0xff]
    %v713 = vld [vmem:[#allocation2 + $0x3b0] sm:$0xff]
    %v714 = vld [vmem:[#allocation2 + $0x3b8] sm:$0xff]
    %v715 = vld [vmem:[#allocation2 + $0x3c0] sm:$0xff]
    %v716 = vld [vmem:[#allocation2 + $0x3c8] sm:$0xff]
    %v717 = vld [vmem:[#allocation2 + $0x3d0] sm:$0xff]
    %v718 = vld [vmem:[#allocation2 + $0x3d8] sm:$0xff]
    %v719 = vld [vmem:[#allocation2 + $0x3e0] sm:$0xff]
    %v720 = vld [vmem:[#allocation2 + $0x3e8] sm:$0xff]
    %v721 = vld [vmem:[#allocation2 + $0x3f0] sm:$0xff]
    %v722 = vld [vmem:[#allocation2 + $0x3f8] sm:$0xff]
    %v723 = vld [vmem:[%s4] sm:$0xf]
    %v725 = vperm.slane %v723, 0
    %v726 = vperm.slane %v723, 1
    %v727 = vperm.slane %v723, 2
    %v728 = vperm.slane %v723, 3
    %v861 = vunpack.c.l.b16 %v595
    %v862 = vunpack.c.h.b16 %v595
    %v863 = vunpack.c.l.b16 %v596
    %v864 = vunpack.c.h.b16 %v596
    %v865 = vunpack.c.l.b16 %v597
    %v866 = vunpack.c.h.b16 %v597
    %v867 = vunpack.c.l.b16 %v598
    %v868 = vunpack.c.h.b16 %v598
    %v869 = vunpack.c.l.b16 %v599
    %v870 = vunpack.c.h.b16 %v599
    %v871 = vunpack.c.l.b16 %v600
    %v872 = vunpack.c.h.b16 %v600
    %v873 = vunpack.c.l.b16 %v601
    %v874 = vunpack.c.h.b16 %v601
    %v875 = vunpack.c.l.b16 %v602
    %v876 = vunpack.c.h.b16 %v602
    %v877 = vunpack.c.l.b16 %v603
    %v878 = vunpack.c.h.b16 %v603
    %v879 = vunpack.c.l.b16 %v604
    %v880 = vunpack.c.h.b16 %v604
    %v881 = vunpack.c.l.b16 %v605
    %v882 = vunpack.c.h.b16 %v605
    %v883 = vunpack.c.l.b16 %v606
    %v884 = vunpack.c.h.b16 %v606
    %v885 = vunpack.c.l.b16 %v607
    %v886 = vunpack.c.h.b16 %v607
    %v887 = vunpack.c.l.b16 %v608
    %v888 = vunpack.c.h.b16 %v608
    %v889 = vunpack.c.l.b16 %v609
    %v890 = vunpack.c.h.b16 %v609
    %v891 = vunpack.c.l.b16 %v610
    %v892 = vunpack.c.h.b16 %v610
    %v893 = vunpack.c.l.b16 %v611
    %v894 = vunpack.c.h.b16 %v611
    %v895 = vunpack.c.l.b16 %v612
    %v896 = vunpack.c.h.b16 %v612
    %v897 = vunpack.c.l.b16 %v613
    %v898 = vunpack.c.h.b16 %v613
    %v899 = vunpack.c.l.b16 %v614
    %v900 = vunpack.c.h.b16 %v614
    %v901 = vunpack.c.l.b16 %v615
    %v902 = vunpack.c.h.b16 %v615
    %v903 = vunpack.c.l.b16 %v616
    %v904 = vunpack.c.h.b16 %v616
    %v905 = vunpack.c.l.b16 %v617
    %v906 = vunpack.c.h.b16 %v617
    %v907 = vunpack.c.l.b16 %v618
    %v908 = vunpack.c.h.b16 %v618
    %v909 = vunpack.c.l.b16 %v619
    %v910 = vunpack.c.h.b16 %v619
    %v911 = vunpack.c.l.b16 %v620
    %v912 = vunpack.c.h.b16 %v620
    %v913 = vunpack.c.l.b16 %v621
    %v914 = vunpack.c.h.b16 %v621
    %v915 = vunpack.c.l.b16 %v622
    %v916 = vunpack.c.h.b16 %v622
    %v917 = vunpack.c.l.b16 %v623
    %v918 = vunpack.c.h.b16 %v623
    %v919 = vunpack.c.l.b16 %v624
    %v920 = vunpack.c.h.b16 %v624
    %v921 = vunpack.c.l.b16 %v625
    %v922 = vunpack.c.h.b16 %v625
    %v923 = vunpack.c.l.b16 %v626
    %v924 = vunpack.c.h.b16 %v626
    %v925 = vunpack.c.l.b16 %v627
    %v926 = vunpack.c.h.b16 %v627
    %v927 = vunpack.c.l.b16 %v628
    %v928 = vunpack.c.h.b16 %v628
    %v929 = vunpack.c.l.b16 %v629
    %v930 = vunpack.c.h.b16 %v629
    %v931 = vunpack.c.l.b16 %v630
    %v932 = vunpack.c.h.b16 %v630
    %v933 = vunpack.c.l.b16 %v631
    %v934 = vunpack.c.h.b16 %v631
    %v935 = vunpack.c.l.b16 %v632
    %v936 = vunpack.c.h.b16 %v632
    %v937 = vunpack.c.l.b16 %v633
    %v938 = vunpack.c.h.b16 %v633
    %v939 = vunpack.c.l.b16 %v634
    %v940 = vunpack.c.h.b16 %v634
    %v941 = vunpack.c.l.b16 %v635
    %v942 = vunpack.c.h.b16 %v635
    %v943 = vunpack.c.l.b16 %v636
    %v944 = vunpack.c.h.b16 %v636
    %v945 = vunpack.c.l.b16 %v637
    %v946 = vunpack.c.h.b16 %v637
    %v947 = vunpack.c.l.b16 %v638
    %v948 = vunpack.c.h.b16 %v638
    %v949 = vunpack.c.l.b16 %v639
    %v950 = vunpack.c.h.b16 %v639
    %v951 = vunpack.c.l.b16 %v640
    %v952 = vunpack.c.h.b16 %v640
    %v953 = vunpack.c.l.b16 %v641
    %v954 = vunpack.c.h.b16 %v641
    %v955 = vunpack.c.l.b16 %v642
    %v956 = vunpack.c.h.b16 %v642
    %v957 = vunpack.c.l.b16 %v643
    %v958 = vunpack.c.h.b16 %v643
    %v959 = vunpack.c.l.b16 %v644
    %v960 = vunpack.c.h.b16 %v644
    %v961 = vunpack.c.l.b16 %v645
    %v962 = vunpack.c.h.b16 %v645
    %v963 = vunpack.c.l.b16 %v646
    %v964 = vunpack.c.h.b16 %v646
    %v965 = vunpack.c.l.b16 %v647
    %v966 = vunpack.c.h.b16 %v647
    %v967 = vunpack.c.l.b16 %v648
    %v968 = vunpack.c.h.b16 %v648
    %v969 = vunpack.c.l.b16 %v649
    %v970 = vunpack.c.h.b16 %v649
    %v971 = vunpack.c.l.b16 %v650
    %v972 = vunpack.c.h.b16 %v650
    %v973 = vunpack.c.l.b16 %v651
    %v974 = vunpack.c.h.b16 %v651
    %v975 = vunpack.c.l.b16 %v652
    %v976 = vunpack.c.h.b16 %v652
    %v977 = vunpack.c.l.b16 %v653
    %v978 = vunpack.c.h.b16 %v653
    %v979 = vunpack.c.l.b16 %v654
    %v980 = vunpack.c.h.b16 %v654
    %v981 = vunpack.c.l.b16 %v655
    %v982 = vunpack.c.h.b16 %v655
    %v983 = vunpack.c.l.b16 %v656
    %v984 = vunpack.c.h.b16 %v656
    %v985 = vunpack.c.l.b16 %v657
    %v986 = vunpack.c.h.b16 %v657
    %v987 = vunpack.c.l.b16 %v658
    %v988 = vunpack.c.h.b16 %v658
    %v989 = vunpack.c.l.b16 %v659
    %v990 = vunpack.c.h.b16 %v659
    %v991 = vunpack.c.l.b16 %v660
    %v992 = vunpack.c.h.b16 %v660
    %v993 = vunpack.c.l.b16 %v661
    %v994 = vunpack.c.h.b16 %v661
    %v995 = vunpack.c.l.b16 %v662
    %v996 = vunpack.c.h.b16 %v662
    %v997 = vunpack.c.l.b16 %v663
    %v998 = vunpack.c.h.b16 %v663
    %v999 = vunpack.c.l.b16 %v664
    %v1000 = vunpack.c.h.b16 %v664
    %v1001 = vunpack.c.l.b16 %v665
    %v1002 = vunpack.c.h.b16 %v665
    %v1003 = vunpack.c.l.b16 %v666
    %v1004 = vunpack.c.h.b16 %v666
    %v1005 = vunpack.c.l.b16 %v667
    %v1006 = vunpack.c.h.b16 %v667
    %v1007 = vunpack.c.l.b16 %v668
    %v1008 = vunpack.c.h.b16 %v668
    %v1009 = vunpack.c.l.b16 %v669
    %v1010 = vunpack.c.h.b16 %v669
    %v1011 = vunpack.c.l.b16 %v670
    %v1012 = vunpack.c.h.b16 %v670
    %v1013 = vunpack.c.l.b16 %v671
    %v1014 = vunpack.c.h.b16 %v671
    %v1015 = vunpack.c.l.b16 %v672
    %v1016 = vunpack.c.h.b16 %v672
    %v1017 = vunpack.c.l.b16 %v673
    %v1018 = vunpack.c.h.b16 %v673
    %v1019 = vunpack.c.l.b16 %v674
    %v1020 = vunpack.c.h.b16 %v674
    %v1021 = vunpack.c.l.b16 %v675
    %v1022 = vunpack.c.h.b16 %v675
    %v1023 = vunpack.c.l.b16 %v676
    %v1024 = vunpack.c.h.b16 %v676
    %v1025 = vunpack.c.l.b16 %v677
    %v1026 = vunpack.c.h.b16 %v677
    %v1027 = vunpack.c.l.b16 %v678
    %v1028 = vunpack.c.h.b16 %v678
    %v1029 = vunpack.c.l.b16 %v679
    %v1030 = vunpack.c.h.b16 %v679
    %v1031 = vunpack.c.l.b16 %v680
    %v1032 = vunpack.c.h.b16 %v680
    %v1033 = vunpack.c.l.b16 %v681
    %v1034 = vunpack.c.h.b16 %v681
    %v1035 = vunpack.c.l.b16 %v682
    %v1036 = vunpack.c.h.b16 %v682
    %v1037 = vunpack.c.l.b16 %v683
    %v1038 = vunpack.c.h.b16 %v683
    %v1039 = vunpack.c.l.b16 %v684
    %v1040 = vunpack.c.h.b16 %v684
    %v1041 = vunpack.c.l.b16 %v685
    %v1042 = vunpack.c.h.b16 %v685
    %v1043 = vunpack.c.l.b16 %v686
    %v1044 = vunpack.c.h.b16 %v686
    %v1045 = vunpack.c.l.b16 %v687
    %v1046 = vunpack.c.h.b16 %v687
    %v1047 = vunpack.c.l.b16 %v688
    %v1048 = vunpack.c.h.b16 %v688
    %v1049 = vunpack.c.l.b16 %v689
    %v1050 = vunpack.c.h.b16 %v689
    %v1051 = vunpack.c.l.b16 %v690
    %v1052 = vunpack.c.h.b16 %v690
    %v1053 = vunpack.c.l.b16 %v691
    %v1054 = vunpack.c.h.b16 %v691
    %v1055 = vunpack.c.l.b16 %v692
    %v1056 = vunpack.c.h.b16 %v692
    %v1057 = vunpack.c.l.b16 %v693
    %v1058 = vunpack.c.h.b16 %v693
    %v1059 = vunpack.c.l.b16 %v694
    %v1060 = vunpack.c.h.b16 %v694
    %v1061 = vunpack.c.l.b16 %v695
    %v1062 = vunpack.c.h.b16 %v695
    %v1063 = vunpack.c.l.b16 %v696
    %v1064 = vunpack.c.h.b16 %v696
    %v1065 = vunpack.c.l.b16 %v697
    %v1066 = vunpack.c.h.b16 %v697
    %v1067 = vunpack.c.l.b16 %v698
    %v1068 = vunpack.c.h.b16 %v698
    %v1069 = vunpack.c.l.b16 %v699
    %v1070 = vunpack.c.h.b16 %v699
    %v1071 = vunpack.c.l.b16 %v700
    %v1072 = vunpack.c.h.b16 %v700
    %v1073 = vunpack.c.l.b16 %v701
    %v1074 = vunpack.c.h.b16 %v701
    %v1075 = vunpack.c.l.b16 %v702
    %v1076 = vunpack.c.h.b16 %v702
    %v1077 = vunpack.c.l.b16 %v703
    %v1078 = vunpack.c.h.b16 %v703
    %v1079 = vunpack.c.l.b16 %v704
    %v1080 = vunpack.c.h.b16 %v704
    %v1081 = vunpack.c.l.b16 %v705
    %v1082 = vunpack.c.h.b16 %v705
    %v1083 = vunpack.c.l.b16 %v706
    %v1084 = vunpack.c.h.b16 %v706
    %v1085 = vunpack.c.l.b16 %v707
    %v1086 = vunpack.c.h.b16 %v707
    %v1087 = vunpack.c.l.b16 %v708
    %v1088 = vunpack.c.h.b16 %v708
    %v1089 = vunpack.c.l.b16 %v709
    %v1090 = vunpack.c.h.b16 %v709
    %v1091 = vunpack.c.l.b16 %v710
    %v1092 = vunpack.c.h.b16 %v710
    %v1093 = vunpack.c.l.b16 %v711
    %v1094 = vunpack.c.h.b16 %v711
    %v1095 = vunpack.c.l.b16 %v712
    %v1096 = vunpack.c.h.b16 %v712
    %v1097 = vunpack.c.l.b16 %v713
    %v1098 = vunpack.c.h.b16 %v713
    %v1099 = vunpack.c.l.b16 %v714
    %v1100 = vunpack.c.h.b16 %v714
    %v1101 = vunpack.c.l.b16 %v715
    %v1102 = vunpack.c.h.b16 %v715
    %v1103 = vunpack.c.l.b16 %v716
    %v1104 = vunpack.c.h.b16 %v716
    %v1105 = vunpack.c.l.b16 %v717
    %v1106 = vunpack.c.h.b16 %v717
    %v1107 = vunpack.c.l.b16 %v718
    %v1108 = vunpack.c.h.b16 %v718
    %v1109 = vunpack.c.l.b16 %v719
    %v1110 = vunpack.c.h.b16 %v719
    %v1111 = vunpack.c.l.b16 %v720
    %v1112 = vunpack.c.h.b16 %v720
    %v1113 = vunpack.c.l.b16 %v721
    %v1114 = vunpack.c.h.b16 %v721
    %v1115 = vunpack.c.l.b16 %v722
    %v1116 = vunpack.c.h.b16 %v722
    %v1117 = vpack.c.b16 %v865, %v861
    %v1118 = vpack.c.b16 %v866, %v862
    %v1119 = vpack.c.b16 %v867, %v863
    %v1120 = vpack.c.b16 %v868, %v864
    %v1121 = vpack.c.b16 %v873, %v869
    %v1122 = vpack.c.b16 %v874, %v870
    %v1123 = vpack.c.b16 %v875, %v871
    %v1124 = vpack.c.b16 %v876, %v872
    %v1125 = vpack.c.b16 %v881, %v877
    %v1126 = vpack.c.b16 %v882, %v878
    %v1127 = vpack.c.b16 %v883, %v879
    %v1128 = vpack.c.b16 %v884, %v880
    %v1129 = vpack.c.b16 %v889, %v885
    %v1130 = vpack.c.b16 %v890, %v886
    %v1131 = vpack.c.b16 %v891, %v887
    %v1132 = vpack.c.b16 %v892, %v888
    %v1133 = vpack.c.b16 %v897, %v893
    %v1134 = vpack.c.b16 %v898, %v894
    %v1135 = vpack.c.b16 %v899, %v895
    %v1136 = vpack.c.b16 %v900, %v896
    %v1137 = vpack.c.b16 %v905, %v901
    %v1138 = vpack.c.b16 %v906, %v902
    %v1139 = vpack.c.b16 %v907, %v903
    %v1140 = vpack.c.b16 %v908, %v904
    %v1141 = vpack.c.b16 %v913, %v909
    %v1142 = vpack.c.b16 %v914, %v910
    %v1143 = vpack.c.b16 %v915, %v911
    %v1144 = vpack.c.b16 %v916, %v912
    %v1145 = vpack.c.b16 %v921, %v917
    %v1146 = vpack.c.b16 %v922, %v918
    %v1147 = vpack.c.b16 %v923, %v919
    %v1148 = vpack.c.b16 %v924, %v920
    %v1149 = vpack.c.b16 %v929, %v925
    %v1150 = vpack.c.b16 %v930, %v926
    %v1151 = vpack.c.b16 %v931, %v927
    %v1152 = vpack.c.b16 %v932, %v928
    %v1153 = vpack.c.b16 %v937, %v933
    %v1154 = vpack.c.b16 %v938, %v934
    %v1155 = vpack.c.b16 %v939, %v935
    %v1156 = vpack.c.b16 %v940, %v936
    %v1157 = vpack.c.b16 %v945, %v941
    %v1158 = vpack.c.b16 %v946, %v942
    %v1159 = vpack.c.b16 %v947, %v943
    %v1160 = vpack.c.b16 %v948, %v944
    %v1161 = vpack.c.b16 %v953, %v949
    %v1162 = vpack.c.b16 %v954, %v950
    %v1163 = vpack.c.b16 %v955, %v951
    %v1164 = vpack.c.b16 %v956, %v952
    %v1165 = vpack.c.b16 %v961, %v957
    %v1166 = vpack.c.b16 %v962, %v958
    %v1167 = vpack.c.b16 %v963, %v959
    %v1168 = vpack.c.b16 %v964, %v960
    %v1169 = vpack.c.b16 %v969, %v965
    %v1170 = vpack.c.b16 %v970, %v966
    %v1171 = vpack.c.b16 %v971, %v967
    %v1172 = vpack.c.b16 %v972, %v968
    %v1173 = vpack.c.b16 %v977, %v973
    %v1174 = vpack.c.b16 %v978, %v974
    %v1175 = vpack.c.b16 %v979, %v975
    %v1176 = vpack.c.b16 %v980, %v976
    %v1177 = vpack.c.b16 %v985, %v981
    %v1178 = vpack.c.b16 %v986, %v982
    %v1179 = vpack.c.b16 %v987, %v983
    %v1180 = vpack.c.b16 %v988, %v984
    %v1181 = vpack.c.b16 %v993, %v989
    %v1182 = vpack.c.b16 %v994, %v990
    %v1183 = vpack.c.b16 %v995, %v991
    %v1184 = vpack.c.b16 %v996, %v992
    %v1185 = vpack.c.b16 %v1001, %v997
    %v1186 = vpack.c.b16 %v1002, %v998
    %v1187 = vpack.c.b16 %v1003, %v999
    %v1188 = vpack.c.b16 %v1004, %v1000
    %v1189 = vpack.c.b16 %v1009, %v1005
    %v1190 = vpack.c.b16 %v1010, %v1006
    %v1191 = vpack.c.b16 %v1011, %v1007
    %v1192 = vpack.c.b16 %v1012, %v1008
    %v1193 = vpack.c.b16 %v1017, %v1013
    %v1194 = vpack.c.b16 %v1018, %v1014
    %v1195 = vpack.c.b16 %v1019, %v1015
    %v1196 = vpack.c.b16 %v1020, %v1016
    %v1197 = vpack.c.b16 %v1025, %v1021
    %v1198 = vpack.c.b16 %v1026, %v1022
    %v1199 = vpack.c.b16 %v1027, %v1023
    %v1200 = vpack.c.b16 %v1028, %v1024
    %v1201 = vpack.c.b16 %v1033, %v1029
    %v1202 = vpack.c.b16 %v1034, %v1030
    %v1203 = vpack.c.b16 %v1035, %v1031
    %v1204 = vpack.c.b16 %v1036, %v1032
    %v1205 = vpack.c.b16 %v1041, %v1037
    %v1206 = vpack.c.b16 %v1042, %v1038
    %v1207 = vpack.c.b16 %v1043, %v1039
    %v1208 = vpack.c.b16 %v1044, %v1040
    %v1209 = vpack.c.b16 %v1049, %v1045
    %v1210 = vpack.c.b16 %v1050, %v1046
    %v1211 = vpack.c.b16 %v1051, %v1047
    %v1212 = vpack.c.b16 %v1052, %v1048
    %v1213 = vpack.c.b16 %v1057, %v1053
    %v1214 = vpack.c.b16 %v1058, %v1054
    %v1215 = vpack.c.b16 %v1059, %v1055
    %v1216 = vpack.c.b16 %v1060, %v1056
    %v1217 = vpack.c.b16 %v1065, %v1061
    %v1218 = vpack.c.b16 %v1066, %v1062
    %v1219 = vpack.c.b16 %v1067, %v1063
    %v1220 = vpack.c.b16 %v1068, %v1064
    %v1221 = vpack.c.b16 %v1073, %v1069
    %v1222 = vpack.c.b16 %v1074, %v1070
    %v1223 = vpack.c.b16 %v1075, %v1071
    %v1224 = vpack.c.b16 %v1076, %v1072
    %v1225 = vpack.c.b16 %v1081, %v1077
    %v1226 = vpack.c.b16 %v1082, %v1078
    %v1227 = vpack.c.b16 %v1083, %v1079
    %v1228 = vpack.c.b16 %v1084, %v1080
    %v1229 = vpack.c.b16 %v1089, %v1085
    %v1230 = vpack.c.b16 %v1090, %v1086
    %v1231 = vpack.c.b16 %v1091, %v1087
    %v1232 = vpack.c.b16 %v1092, %v1088
    %v1233 = vpack.c.b16 %v1097, %v1093
    %v1234 = vpack.c.b16 %v1098, %v1094
    %v1235 = vpack.c.b16 %v1099, %v1095
    %v1236 = vpack.c.b16 %v1100, %v1096
    %v1237 = vpack.c.b16 %v1105, %v1101
    %v1238 = vpack.c.b16 %v1106, %v1102
    %v1239 = vpack.c.b16 %v1107, %v1103
    %v1240 = vpack.c.b16 %v1108, %v1104
    %v1241 = vpack.c.b16 %v1113, %v1109
    %v1242 = vpack.c.b16 %v1114, %v1110
    %v1243 = vpack.c.b16 %v1115, %v1111
    %v1244 = vpack.c.b16 %v1116, %v1112
    %1373 = vmatpush.bf16.msra.mxu0 %v1145
    %1374 = vmatpush.bf16.msra.mxu0 %v1141
    %1375 = vmatpush.bf16.msra.mxu0 %v1137
    %1376 = vmatpush.bf16.msra.mxu0 %v1133
    %1377 = vmatpush.bf16.msra.mxu0 %v1129
    %1378 = vmatpush.bf16.msra.mxu0 %v1125
    %1379 = vmatpush.bf16.msra.mxu0 %v1121
    %1380 = vmatpush.bf16.msra.mxu0 %v1117
    %1381 = vmatmul.bf16.gmra.mxu0 %v591
    %v1382 = vpop.f32.mrf.mxu0
    %v1383 = vadd.f32 %v725, %v1382
    %v1384 = vpop.f32.mrf.mxu0
    %1385 = vdwg.mxu0
    %1386 = vmatpush.bf16.msra.mxu0 %v1177
    %1387 = vmatpush.bf16.msra.mxu0 %v1173
    %1388 = vmatpush.bf16.msra.mxu0 %v1169
    %1389 = vmatpush.bf16.msra.mxu0 %v1165
    %1390 = vmatpush.bf16.msra.mxu0 %v1161
    %1391 = vmatpush.bf16.msra.mxu0 %v1157
    %1392 = vmatpush.bf16.msra.mxu0 %v1153
    %1393 = vmatpush.bf16.msra.mxu0 %v1149
    %1394 = vmatmul.bf16.gmra.mxu0 %v592
    %v1395 = vpop.f32.mrf.mxu0
    %v1396 = vadd.f32 %v1383, %v1395
    %v1397 = vpop.f32.mrf.mxu0
    %1398 = vdwg.mxu0
    %1399 = vmatpush.bf16.msra.mxu0 %v1209
    %1400 = vmatpush.bf16.msra.mxu0 %v1205
    %1401 = vmatpush.bf16.msra.mxu0 %v1201
    %1402 = vmatpush.bf16.msra.mxu0 %v1197
    %1403 = vmatpush.bf16.msra.mxu0 %v1193
    %1404 = vmatpush.bf16.msra.mxu0 %v1189
    %1405 = vmatpush.bf16.msra.mxu0 %v1185
    %1406 = vmatpush.bf16.msra.mxu0 %v1181
    %1407 = vmatmul.bf16.gmra.mxu0 %v593
    %v1408 = vpop.f32.mrf.mxu0
    %v1409 = vadd.f32 %v1396, %v1408
    %v1410 = vpop.f32.mrf.mxu0
    %1411 = vdwg.mxu0
    %1412 = vmatpush.bf16.msra.mxu0 %v1241
    %1413 = vmatpush.bf16.msra.mxu0 %v1237
    %1414 = vmatpush.bf16.msra.mxu0 %v1233
    %1415 = vmatpush.bf16.msra.mxu0 %v1229
    %1416 = vmatpush.bf16.msra.mxu0 %v1225
    %1417 = vmatpush.bf16.msra.mxu0 %v1221
    %1418 = vmatpush.bf16.msra.mxu0 %v1217
    %1419 = vmatpush.bf16.msra.mxu0 %v1213
    %1420 = vmatmul.bf16.gmra.mxu0 %v594
    %v1421 = vpop.f32.mrf.mxu0
    %v1422 = vadd.f32 %v1409, %v1421
    %v1423 = vpop.f32.mrf.mxu0
    %1424 = vdwg.mxu0
    %1425 = vmatpush.bf16.msra.mxu0 %v1146
    %1426 = vmatpush.bf16.msra.mxu0 %v1142
    %1427 = vmatpush.bf16.msra.mxu0 %v1138
    %1428 = vmatpush.bf16.msra.mxu0 %v1134
    %1429 = vmatpush.bf16.msra.mxu0 %v1130
    %1430 = vmatpush.bf16.msra.mxu0 %v1126
    %1431 = vmatpush.bf16.msra.mxu0 %v1122
    %1432 = vmatpush.bf16.msra.mxu0 %v1118
    %1433 = vmatmul.bf16.gmra.mxu0 %v591
    %v1434 = vpop.f32.mrf.mxu0
    %v1435 = vadd.f32 %v726, %v1434
    %v1436 = vpop.f32.mrf.mxu0
    %1437 = vdwg.mxu0
    %1438 = vmatpush.bf16.msra.mxu0 %v1178
    %1439 = vmatpush.bf16.msra.mxu0 %v1174
    %1440 = vmatpush.bf16.msra.mxu0 %v1170
    %1441 = vmatpush.bf16.msra.mxu0 %v1166
    %1442 = vmatpush.bf16.msra.mxu0 %v1162
    %1443 = vmatpush.bf16.msra.mxu0 %v1158
    %1444 = vmatpush.bf16.msra.mxu0 %v1154
    %1445 = vmatpush.bf16.msra.mxu0 %v1150
    %1446 = vmatmul.bf16.gmra.mxu0 %v592
    %v1447 = vpop.f32.mrf.mxu0
    %v1448 = vadd.f32 %v1435, %v1447
    %v1449 = vpop.f32.mrf.mxu0
    %1450 = vdwg.mxu0
    %1451 = vmatpush.bf16.msra.mxu0 %v1210
    %1452 = vmatpush.bf16.msra.mxu0 %v1206
    %1453 = vmatpush.bf16.msra.mxu0 %v1202
    %1454 = vmatpush.bf16.msra.mxu0 %v1198
    %1455 = vmatpush.bf16.msra.mxu0 %v1194
    %1456 = vmatpush.bf16.msra.mxu0 %v1190
    %1457 = vmatpush.bf16.msra.mxu0 %v1186
    %1458 = vmatpush.bf16.msra.mxu0 %v1182
    %1459 = vmatmul.bf16.gmra.mxu0 %v593
    %v1460 = vpop.f32.mrf.mxu0
    %v1461 = vadd.f32 %v1448, %v1460
    %v1462 = vpop.f32.mrf.mxu0
    %1463 = vdwg.mxu0
    %1464 = vmatpush.bf16.msra.mxu0 %v1242
    %1465 = vmatpush.bf16.msra.mxu0 %v1238
    %1466 = vmatpush.bf16.msra.mxu0 %v1234
    %1467 = vmatpush.bf16.msra.mxu0 %v1230
    %1468 = vmatpush.bf16.msra.mxu0 %v1226
    %1469 = vmatpush.bf16.msra.mxu0 %v1222
    %1470 = vmatpush.bf16.msra.mxu0 %v1218
    %1471 = vmatpush.bf16.msra.mxu0 %v1214
    %1472 = vmatmul.bf16.gmra.mxu0 %v594
    %v1473 = vpop.f32.mrf.mxu0
    %v1474 = vadd.f32 %v1461, %v1473
    %v1475 = vpop.f32.mrf.mxu0
    %1476 = vdwg.mxu0
    %1477 = vmatpush.bf16.msra.mxu0 %v1147
    %1478 = vmatpush.bf16.msra.mxu0 %v1143
    %1479 = vmatpush.bf16.msra.mxu0 %v1139
    %1480 = vmatpush.bf16.msra.mxu0 %v1135
    %1481 = vmatpush.bf16.msra.mxu0 %v1131
    %1482 = vmatpush.bf16.msra.mxu0 %v1127
    %1483 = vmatpush.bf16.msra.mxu0 %v1123
    %1484 = vmatpush.bf16.msra.mxu0 %v1119
    %1485 = vmatmul.bf16.gmra.mxu0 %v591
    %v1486 = vpop.f32.mrf.mxu0
    %v1487 = vadd.f32 %v727, %v1486
    %v1488 = vpop.f32.mrf.mxu0
    %1489 = vdwg.mxu0
    %1490 = vmatpush.bf16.msra.mxu0 %v1179
    %1491 = vmatpush.bf16.msra.mxu0 %v1175
    %1492 = vmatpush.bf16.msra.mxu0 %v1171
    %1493 = vmatpush.bf16.msra.mxu0 %v1167
    %1494 = vmatpush.bf16.msra.mxu0 %v1163
    %1495 = vmatpush.bf16.msra.mxu0 %v1159
    %1496 = vmatpush.bf16.msra.mxu0 %v1155
    %1497 = vmatpush.bf16.msra.mxu0 %v1151
    %1498 = vmatmul.bf16.gmra.mxu0 %v592
    %v1499 = vpop.f32.mrf.mxu0
    %v1500 = vadd.f32 %v1487, %v1499
    %v1501 = vpop.f32.mrf.mxu0
    %1502 = vdwg.mxu0
    %1503 = vmatpush.bf16.msra.mxu0 %v1211
    %1504 = vmatpush.bf16.msra.mxu0 %v1207
    %1505 = vmatpush.bf16.msra.mxu0 %v1203
    %1506 = vmatpush.bf16.msra.mxu0 %v1199
    %1507 = vmatpush.bf16.msra.mxu0 %v1195
    %1508 = vmatpush.bf16.msra.mxu0 %v1191
    %1509 = vmatpush.bf16.msra.mxu0 %v1187
    %1510 = vmatpush.bf16.msra.mxu0 %v1183
    %1511 = vmatmul.bf16.gmra.mxu0 %v593
    %v1512 = vpop.f32.mrf.mxu0
    %v1513 = vadd.f32 %v1500, %v1512
    %v1514 = vpop.f32.mrf.mxu0
    %1515 = vdwg.mxu0
    %1516 = vmatpush.bf16.msra.mxu0 %v1243
    %1517 = vmatpush.bf16.msra.mxu0 %v1239
    %1518 = vmatpush.bf16.msra.mxu0 %v1235
    %1519 = vmatpush.bf16.msra.mxu0 %v1231
    %1520 = vmatpush.bf16.msra.mxu0 %v1227
    %1521 = vmatpush.bf16.msra.mxu0 %v1223
    %1522 = vmatpush.bf16.msra.mxu0 %v1219
    %1523 = vmatpush.bf16.msra.mxu0 %v1215
    %1524 = vmatmul.bf16.gmra.mxu0 %v594
    %v1525 = vpop.f32.mrf.mxu0
    %v1526 = vadd.f32 %v1513, %v1525
    %v1527 = vpop.f32.mrf.mxu0
    %1528 = vdwg.mxu0
    %1529 = vmatpush.bf16.msra.mxu0 %v1148
    %1530 = vmatpush.bf16.msra.mxu0 %v1144
    %1531 = vmatpush.bf16.msra.mxu0 %v1140
    %1532 = vmatpush.bf16.msra.mxu0 %v1136
    %1533 = vmatpush.bf16.msra.mxu0 %v1132
    %1534 = vmatpush.bf16.msra.mxu0 %v1128
    %1535 = vmatpush.bf16.msra.mxu0 %v1124
    %1536 = vmatpush.bf16.msra.mxu0 %v1120
    %1537 = vmatmul.bf16.gmra.mxu0 %v591
    %v1538 = vpop.f32.mrf.mxu0
    %v1539 = vadd.f32 %v728, %v1538
    %v1540 = vpop.f32.mrf.mxu0
    %1541 = vdwg.mxu0
    %1542 = vmatpush.bf16.msra.mxu0 %v1180
    %1543 = vmatpush.bf16.msra.mxu0 %v1176
    %1544 = vmatpush.bf16.msra.mxu0 %v1172
    %1545 = vmatpush.bf16.msra.mxu0 %v1168
    %1546 = vmatpush.bf16.msra.mxu0 %v1164
    %1547 = vmatpush.bf16.msra.mxu0 %v1160
    %1548 = vmatpush.bf16.msra.mxu0 %v1156
    %1549 = vmatpush.bf16.msra.mxu0 %v1152
    %1550 = vmatmul.bf16.gmra.mxu0 %v592
    %v1551 = vpop.f32.mrf.mxu0
    %v1552 = vadd.f32 %v1539, %v1551
    %v1553 = vpop.f32.mrf.mxu0
    %1554 = vdwg.mxu0
    %1555 = vmatpush.bf16.msra.mxu0 %v1212
    %1556 = vmatpush.bf16.msra.mxu0 %v1208
    %1557 = vmatpush.bf16.msra.mxu0 %v1204
    %1558 = vmatpush.bf16.msra.mxu0 %v1200
    %1559 = vmatpush.bf16.msra.mxu0 %v1196
    %1560 = vmatpush.bf16.msra.mxu0 %v1192
    %1561 = vmatpush.bf16.msra.mxu0 %v1188
    %1562 = vmatpush.bf16.msra.mxu0 %v1184
    %1563 = vmatmul.bf16.gmra.mxu0 %v593
    %v1564 = vpop.f32.mrf.mxu0
    %v1565 = vadd.f32 %v1552, %v1564
    %v1566 = vpop.f32.mrf.mxu0
    %1567 = vdwg.mxu0
    %1568 = vmatpush.bf16.msra.mxu0 %v1244
    %1569 = vmatpush.bf16.msra.mxu0 %v1240
    %1570 = vmatpush.bf16.msra.mxu0 %v1236
    %1571 = vmatpush.bf16.msra.mxu0 %v1232
    %1572 = vmatpush.bf16.msra.mxu0 %v1228
    %1573 = vmatpush.bf16.msra.mxu0 %v1224
    %1574 = vmatpush.bf16.msra.mxu0 %v1220
    %1575 = vmatpush.bf16.msra.mxu0 %v1216
    %1576 = vmatmul.bf16.gmra.mxu0 %v594
    %v1577 = vpop.f32.mrf.mxu0
    %v1578 = vadd.f32 %v1565, %v1577
    %v1579 = vpop.f32.mrf.mxu0
    %1580 = vdwg.mxu0
    %vm1581 = vcmp.gt.f32.partialorder %v1422, 0.0
    %vm1582 = vcmp.gt.f32.partialorder %v1474, 0.0
    %vm1583 = vcmp.gt.f32.partialorder %v1526, 0.0
    %vm1584 = vcmp.gt.f32.partialorder %v1578, 0.0
    %v1585 = vmul.f32 %v1422, 0.2
    %v1586 = vmul.f32 %v1474, 0.2
    %v1587 = vmul.f32 %v1526, 0.2
    %v1588 = vmul.f32 %v1578, 0.2
    %v1589 = vsel %vm1581, %v1422, %v1585
    %v1590 = vsel %vm1582, %v1474, %v1586
    %v1591 = vsel %vm1583, %v1526, %v1587
    %v1592 = vsel %vm1584, %v1578, %v1588
    %v1593 = vpack.c.bf16 %v1589, %v1589
    %v1594 = vpack.c.bf16 %v1590, %v1590
    %v1595 = vpack.c.bf16 %v1591, %v1591
    %v1596 = vpack.c.bf16 %v1592, %v1592
    %v1597 = vld [vmem:[#allocation4] sm:$0xff]
    %v1598 = vld [vmem:[#allocation4 + $0x8] sm:$0xff]
    %v1599 = vld [vmem:[#allocation4 + $0x10] sm:$0xff]
    %v1600 = vld [vmem:[#allocation4 + $0x18] sm:$0xff]
    %v1601 = vld [vmem:[#allocation4 + $0x20] sm:$0xff]
    %v1602 = vld [vmem:[#allocation4 + $0x28] sm:$0xff]
    %v1603 = vld [vmem:[#allocation4 + $0x30] sm:$0xff]
    %v1604 = vld [vmem:[#allocation4 + $0x38] sm:$0xff]
    %v1605 = vld [vmem:[#allocation4 + $0x40] sm:$0xff]
    %v1606 = vld [vmem:[#allocation4 + $0x48] sm:$0xff]
    %v1607 = vld [vmem:[#allocation4 + $0x50] sm:$0xff]
    %v1608 = vld [vmem:[#allocation4 + $0x58] sm:$0xff]
    %v1609 = vld [vmem:[#allocation4 + $0x60] sm:$0xff]
    %v1610 = vld [vmem:[#allocation4 + $0x68] sm:$0xff]
    %v1611 = vld [vmem:[#allocation4 + $0x70] sm:$0xff]
    %v1612 = vld [vmem:[#allocation4 + $0x78] sm:$0xff]
    %v1613 = vld [vmem:[#allocation4 + $0x80] sm:$0xff]
    %v1614 = vld [vmem:[#allocation4 + $0x88] sm:$0xff]
    %v1615 = vld [vmem:[#allocation4 + $0x90] sm:$0xff]
    %v1616 = vld [vmem:[#allocation4 + $0x98] sm:$0xff]
    %v1617 = vld [vmem:[#allocation4 + $0xa0] sm:$0xff]
    %v1618 = vld [vmem:[#allocation4 + $0xa8] sm:$0xff]
    %v1619 = vld [vmem:[#allocation4 + $0xb0] sm:$0xff]
    %v1620 = vld [vmem:[#allocation4 + $0xb8] sm:$0xff]
    %v1621 = vld [vmem:[#allocation4 + $0xc0] sm:$0xff]
    %v1622 = vld [vmem:[#allocation4 + $0xc8] sm:$0xff]
    %v1623 = vld [vmem:[#allocation4 + $0xd0] sm:$0xff]
    %v1624 = vld [vmem:[#allocation4 + $0xd8] sm:$0xff]
    %v1625 = vld [vmem:[#allocation4 + $0xe0] sm:$0xff]
    %v1626 = vld [vmem:[#allocation4 + $0xe8] sm:$0xff]
    %v1627 = vld [vmem:[#allocation4 + $0xf0] sm:$0xff]
    %v1628 = vld [vmem:[#allocation4 + $0xf8] sm:$0xff]
    %v1629 = vld [vmem:[#allocation4 + $0x100] sm:$0xff]
    %v1630 = vld [vmem:[#allocation4 + $0x108] sm:$0xff]
    %v1631 = vld [vmem:[#allocation4 + $0x110] sm:$0xff]
    %v1632 = vld [vmem:[#allocation4 + $0x118] sm:$0xff]
    %v1633 = vld [vmem:[#allocation4 + $0x120] sm:$0xff]
    %v1634 = vld [vmem:[#allocation4 + $0x128] sm:$0xff]
    %v1635 = vld [vmem:[#allocation4 + $0x130] sm:$0xff]
    %v1636 = vld [vmem:[#allocation4 + $0x138] sm:$0xff]
    %v1637 = vld [vmem:[#allocation4 + $0x140] sm:$0xff]
    %v1638 = vld [vmem:[#allocation4 + $0x148] sm:$0xff]
    %v1639 = vld [vmem:[#allocation4 + $0x150] sm:$0xff]
    %v1640 = vld [vmem:[#allocation4 + $0x158] sm:$0xff]
    %v1641 = vld [vmem:[#allocation4 + $0x160] sm:$0xff]
    %v1642 = vld [vmem:[#allocation4 + $0x168] sm:$0xff]
    %v1643 = vld [vmem:[#allocation4 + $0x170] sm:$0xff]
    %v1644 = vld [vmem:[#allocation4 + $0x178] sm:$0xff]
    %v1645 = vld [vmem:[#allocation4 + $0x180] sm:$0xff]
    %v1646 = vld [vmem:[#allocation4 + $0x188] sm:$0xff]
    %v1647 = vld [vmem:[#allocation4 + $0x190] sm:$0xff]
    %v1648 = vld [vmem:[#allocation4 + $0x198] sm:$0xff]
    %v1649 = vld [vmem:[#allocation4 + $0x1a0] sm:$0xff]
    %v1650 = vld [vmem:[#allocation4 + $0x1a8] sm:$0xff]
    %v1651 = vld [vmem:[#allocation4 + $0x1b0] sm:$0xff]
    %v1652 = vld [vmem:[#allocation4 + $0x1b8] sm:$0xff]
    %v1653 = vld [vmem:[#allocation4 + $0x1c0] sm:$0xff]
    %v1654 = vld [vmem:[#allocation4 + $0x1c8] sm:$0xff]
    %v1655 = vld [vmem:[#allocation4 + $0x1d0] sm:$0xff]
    %v1656 = vld [vmem:[#allocation4 + $0x1d8] sm:$0xff]
    %v1657 = vld [vmem:[#allocation4 + $0x1e0] sm:$0xff]
    %v1658 = vld [vmem:[#allocation4 + $0x1e8] sm:$0xff]
    %v1659 = vld [vmem:[#allocation4 + $0x1f0] sm:$0xff]
    %v1660 = vld [vmem:[#allocation4 + $0x1f8] sm:$0xff]
    %v1661 = vld [vmem:[#allocation4 + $0x200] sm:$0xff]
    %v1662 = vld [vmem:[#allocation4 + $0x208] sm:$0xff]
    %v1663 = vld [vmem:[#allocation4 + $0x210] sm:$0xff]
    %v1664 = vld [vmem:[#allocation4 + $0x218] sm:$0xff]
    %v1665 = vld [vmem:[#allocation4 + $0x220] sm:$0xff]
    %v1666 = vld [vmem:[#allocation4 + $0x228] sm:$0xff]
    %v1667 = vld [vmem:[#allocation4 + $0x230] sm:$0xff]
    %v1668 = vld [vmem:[#allocation4 + $0x238] sm:$0xff]
    %v1669 = vld [vmem:[#allocation4 + $0x240] sm:$0xff]
    %v1670 = vld [vmem:[#allocation4 + $0x248] sm:$0xff]
    %v1671 = vld [vmem:[#allocation4 + $0x250] sm:$0xff]
    %v1672 = vld [vmem:[#allocation4 + $0x258] sm:$0xff]
    %v1673 = vld [vmem:[#allocation4 + $0x260] sm:$0xff]
    %v1674 = vld [vmem:[#allocation4 + $0x268] sm:$0xff]
    %v1675 = vld [vmem:[#allocation4 + $0x270] sm:$0xff]
    %v1676 = vld [vmem:[#allocation4 + $0x278] sm:$0xff]
    %v1677 = vld [vmem:[#allocation4 + $0x280] sm:$0xff]
    %v1678 = vld [vmem:[#allocation4 + $0x288] sm:$0xff]
    %v1679 = vld [vmem:[#allocation4 + $0x290] sm:$0xff]
    %v1680 = vld [vmem:[#allocation4 + $0x298] sm:$0xff]
    %v1681 = vld [vmem:[#allocation4 + $0x2a0] sm:$0xff]
    %v1682 = vld [vmem:[#allocation4 + $0x2a8] sm:$0xff]
    %v1683 = vld [vmem:[#allocation4 + $0x2b0] sm:$0xff]
    %v1684 = vld [vmem:[#allocation4 + $0x2b8] sm:$0xff]
    %v1685 = vld [vmem:[#allocation4 + $0x2c0] sm:$0xff]
    %v1686 = vld [vmem:[#allocation4 + $0x2c8] sm:$0xff]
    %v1687 = vld [vmem:[#allocation4 + $0x2d0] sm:$0xff]
    %v1688 = vld [vmem:[#allocation4 + $0x2d8] sm:$0xff]
    %v1689 = vld [vmem:[#allocation4 + $0x2e0] sm:$0xff]
    %v1690 = vld [vmem:[#allocation4 + $0x2e8] sm:$0xff]
    %v1691 = vld [vmem:[#allocation4 + $0x2f0] sm:$0xff]
    %v1692 = vld [vmem:[#allocation4 + $0x2f8] sm:$0xff]
    %v1693 = vld [vmem:[#allocation4 + $0x300] sm:$0xff]
    %v1694 = vld [vmem:[#allocation4 + $0x308] sm:$0xff]
    %v1695 = vld [vmem:[#allocation4 + $0x310] sm:$0xff]
    %v1696 = vld [vmem:[#allocation4 + $0x318] sm:$0xff]
    %v1697 = vld [vmem:[#allocation4 + $0x320] sm:$0xff]
    %v1698 = vld [vmem:[#allocation4 + $0x328] sm:$0xff]
    %v1699 = vld [vmem:[#allocation4 + $0x330] sm:$0xff]
    %v1700 = vld [vmem:[#allocation4 + $0x338] sm:$0xff]
    %v1701 = vld [vmem:[#allocation4 + $0x340] sm:$0xff]
    %v1702 = vld [vmem:[#allocation4 + $0x348] sm:$0xff]
    %v1703 = vld [vmem:[#allocation4 + $0x350] sm:$0xff]
    %v1704 = vld [vmem:[#allocation4 + $0x358] sm:$0xff]
    %v1705 = vld [vmem:[#allocation4 + $0x360] sm:$0xff]
    %v1706 = vld [vmem:[#allocation4 + $0x368] sm:$0xff]
    %v1707 = vld [vmem:[#allocation4 + $0x370] sm:$0xff]
    %v1708 = vld [vmem:[#allocation4 + $0x378] sm:$0xff]
    %v1709 = vld [vmem:[#allocation4 + $0x380] sm:$0xff]
    %v1710 = vld [vmem:[#allocation4 + $0x388] sm:$0xff]
    %v1711 = vld [vmem:[#allocation4 + $0x390] sm:$0xff]
    %v1712 = vld [vmem:[#allocation4 + $0x398] sm:$0xff]
    %v1713 = vld [vmem:[#allocation4 + $0x3a0] sm:$0xff]
    %v1714 = vld [vmem:[#allocation4 + $0x3a8] sm:$0xff]
    %v1715 = vld [vmem:[#allocation4 + $0x3b0] sm:$0xff]
    %v1716 = vld [vmem:[#allocation4 + $0x3b8] sm:$0xff]
    %v1717 = vld [vmem:[#allocation4 + $0x3c0] sm:$0xff]
    %v1718 = vld [vmem:[#allocation4 + $0x3c8] sm:$0xff]
    %v1719 = vld [vmem:[#allocation4 + $0x3d0] sm:$0xff]
    %v1720 = vld [vmem:[#allocation4 + $0x3d8] sm:$0xff]
    %v1721 = vld [vmem:[#allocation4 + $0x3e0] sm:$0xff]
    %v1722 = vld [vmem:[#allocation4 + $0x3e8] sm:$0xff]
    %v1723 = vld [vmem:[#allocation4 + $0x3f0] sm:$0xff]
    %v1724 = vld [vmem:[#allocation4 + $0x3f8] sm:$0xff]
    %v1725 = vld [vmem:[%s6] sm:$0xf]
    %v1727 = vperm.slane %v1725, 0
    %v1728 = vperm.slane %v1725, 1
    %v1729 = vperm.slane %v1725, 2
    %v1730 = vperm.slane %v1725, 3
    %v1863 = vunpack.c.l.b16 %v1597
    %v1864 = vunpack.c.h.b16 %v1597
    %v1865 = vunpack.c.l.b16 %v1598
    %v1866 = vunpack.c.h.b16 %v1598
    %v1867 = vunpack.c.l.b16 %v1599
    %v1868 = vunpack.c.h.b16 %v1599
    %v1869 = vunpack.c.l.b16 %v1600
    %v1870 = vunpack.c.h.b16 %v1600
    %v1871 = vunpack.c.l.b16 %v1601
    %v1872 = vunpack.c.h.b16 %v1601
    %v1873 = vunpack.c.l.b16 %v1602
    %v1874 = vunpack.c.h.b16 %v1602
    %v1875 = vunpack.c.l.b16 %v1603
    %v1876 = vunpack.c.h.b16 %v1603
    %v1877 = vunpack.c.l.b16 %v1604
    %v1878 = vunpack.c.h.b16 %v1604
    %v1879 = vunpack.c.l.b16 %v1605
    %v1880 = vunpack.c.h.b16 %v1605
    %v1881 = vunpack.c.l.b16 %v1606
    %v1882 = vunpack.c.h.b16 %v1606
    %v1883 = vunpack.c.l.b16 %v1607
    %v1884 = vunpack.c.h.b16 %v1607
    %v1885 = vunpack.c.l.b16 %v1608
    %v1886 = vunpack.c.h.b16 %v1608
    %v1887 = vunpack.c.l.b16 %v1609
    %v1888 = vunpack.c.h.b16 %v1609
    %v1889 = vunpack.c.l.b16 %v1610
    %v1890 = vunpack.c.h.b16 %v1610
    %v1891 = vunpack.c.l.b16 %v1611
    %v1892 = vunpack.c.h.b16 %v1611
    %v1893 = vunpack.c.l.b16 %v1612
    %v1894 = vunpack.c.h.b16 %v1612
    %v1895 = vunpack.c.l.b16 %v1613
    %v1896 = vunpack.c.h.b16 %v1613
    %v1897 = vunpack.c.l.b16 %v1614
    %v1898 = vunpack.c.h.b16 %v1614
    %v1899 = vunpack.c.l.b16 %v1615
    %v1900 = vunpack.c.h.b16 %v1615
    %v1901 = vunpack.c.l.b16 %v1616
    %v1902 = vunpack.c.h.b16 %v1616
    %v1903 = vunpack.c.l.b16 %v1617
    %v1904 = vunpack.c.h.b16 %v1617
    %v1905 = vunpack.c.l.b16 %v1618
    %v1906 = vunpack.c.h.b16 %v1618
    %v1907 = vunpack.c.l.b16 %v1619
    %v1908 = vunpack.c.h.b16 %v1619
    %v1909 = vunpack.c.l.b16 %v1620
    %v1910 = vunpack.c.h.b16 %v1620
    %v1911 = vunpack.c.l.b16 %v1621
    %v1912 = vunpack.c.h.b16 %v1621
    %v1913 = vunpack.c.l.b16 %v1622
    %v1914 = vunpack.c.h.b16 %v1622
    %v1915 = vunpack.c.l.b16 %v1623
    %v1916 = vunpack.c.h.b16 %v1623
    %v1917 = vunpack.c.l.b16 %v1624
    %v1918 = vunpack.c.h.b16 %v1624
    %v1919 = vunpack.c.l.b16 %v1625
    %v1920 = vunpack.c.h.b16 %v1625
    %v1921 = vunpack.c.l.b16 %v1626
    %v1922 = vunpack.c.h.b16 %v1626
    %v1923 = vunpack.c.l.b16 %v1627
    %v1924 = vunpack.c.h.b16 %v1627
    %v1925 = vunpack.c.l.b16 %v1628
    %v1926 = vunpack.c.h.b16 %v1628
    %v1927 = vunpack.c.l.b16 %v1629
    %v1928 = vunpack.c.h.b16 %v1629
    %v1929 = vunpack.c.l.b16 %v1630
    %v1930 = vunpack.c.h.b16 %v1630
    %v1931 = vunpack.c.l.b16 %v1631
    %v1932 = vunpack.c.h.b16 %v1631
    %v1933 = vunpack.c.l.b16 %v1632
    %v1934 = vunpack.c.h.b16 %v1632
    %v1935 = vunpack.c.l.b16 %v1633
    %v1936 = vunpack.c.h.b16 %v1633
    %v1937 = vunpack.c.l.b16 %v1634
    %v1938 = vunpack.c.h.b16 %v1634
    %v1939 = vunpack.c.l.b16 %v1635
    %v1940 = vunpack.c.h.b16 %v1635
    %v1941 = vunpack.c.l.b16 %v1636
    %v1942 = vunpack.c.h.b16 %v1636
    %v1943 = vunpack.c.l.b16 %v1637
    %v1944 = vunpack.c.h.b16 %v1637
    %v1945 = vunpack.c.l.b16 %v1638
    %v1946 = vunpack.c.h.b16 %v1638
    %v1947 = vunpack.c.l.b16 %v1639
    %v1948 = vunpack.c.h.b16 %v1639
    %v1949 = vunpack.c.l.b16 %v1640
    %v1950 = vunpack.c.h.b16 %v1640
    %v1951 = vunpack.c.l.b16 %v1641
    %v1952 = vunpack.c.h.b16 %v1641
    %v1953 = vunpack.c.l.b16 %v1642
    %v1954 = vunpack.c.h.b16 %v1642
    %v1955 = vunpack.c.l.b16 %v1643
    %v1956 = vunpack.c.h.b16 %v1643
    %v1957 = vunpack.c.l.b16 %v1644
    %v1958 = vunpack.c.h.b16 %v1644
    %v1959 = vunpack.c.l.b16 %v1645
    %v1960 = vunpack.c.h.b16 %v1645
    %v1961 = vunpack.c.l.b16 %v1646
    %v1962 = vunpack.c.h.b16 %v1646
    %v1963 = vunpack.c.l.b16 %v1647
    %v1964 = vunpack.c.h.b16 %v1647
    %v1965 = vunpack.c.l.b16 %v1648
    %v1966 = vunpack.c.h.b16 %v1648
    %v1967 = vunpack.c.l.b16 %v1649
    %v1968 = vunpack.c.h.b16 %v1649
    %v1969 = vunpack.c.l.b16 %v1650
    %v1970 = vunpack.c.h.b16 %v1650
    %v1971 = vunpack.c.l.b16 %v1651
    %v1972 = vunpack.c.h.b16 %v1651
    %v1973 = vunpack.c.l.b16 %v1652
    %v1974 = vunpack.c.h.b16 %v1652
    %v1975 = vunpack.c.l.b16 %v1653
    %v1976 = vunpack.c.h.b16 %v1653
    %v1977 = vunpack.c.l.b16 %v1654
    %v1978 = vunpack.c.h.b16 %v1654
    %v1979 = vunpack.c.l.b16 %v1655
    %v1980 = vunpack.c.h.b16 %v1655
    %v1981 = vunpack.c.l.b16 %v1656
    %v1982 = vunpack.c.h.b16 %v1656
    %v1983 = vunpack.c.l.b16 %v1657
    %v1984 = vunpack.c.h.b16 %v1657
    %v1985 = vunpack.c.l.b16 %v1658
    %v1986 = vunpack.c.h.b16 %v1658
    %v1987 = vunpack.c.l.b16 %v1659
    %v1988 = vunpack.c.h.b16 %v1659
    %v1989 = vunpack.c.l.b16 %v1660
    %v1990 = vunpack.c.h.b16 %v1660
    %v1991 = vunpack.c.l.b16 %v1661
    %v1992 = vunpack.c.h.b16 %v1661
    %v1993 = vunpack.c.l.b16 %v1662
    %v1994 = vunpack.c.h.b16 %v1662
    %v1995 = vunpack.c.l.b16 %v1663
    %v1996 = vunpack.c.h.b16 %v1663
    %v1997 = vunpack.c.l.b16 %v1664
    %v1998 = vunpack.c.h.b16 %v1664
    %v1999 = vunpack.c.l.b16 %v1665
    %v2000 = vunpack.c.h.b16 %v1665
    %v2001 = vunpack.c.l.b16 %v1666
    %v2002 = vunpack.c.h.b16 %v1666
    %v2003 = vunpack.c.l.b16 %v1667
    %v2004 = vunpack.c.h.b16 %v1667
    %v2005 = vunpack.c.l.b16 %v1668
    %v2006 = vunpack.c.h.b16 %v1668
    %v2007 = vunpack.c.l.b16 %v1669
    %v2008 = vunpack.c.h.b16 %v1669
    %v2009 = vunpack.c.l.b16 %v1670
    %v2010 = vunpack.c.h.b16 %v1670
    %v2011 = vunpack.c.l.b16 %v1671
    %v2012 = vunpack.c.h.b16 %v1671
    %v2013 = vunpack.c.l.b16 %v1672
    %v2014 = vunpack.c.h.b16 %v1672
    %v2015 = vunpack.c.l.b16 %v1673
    %v2016 = vunpack.c.h.b16 %v1673
    %v2017 = vunpack.c.l.b16 %v1674
    %v2018 = vunpack.c.h.b16 %v1674
    %v2019 = vunpack.c.l.b16 %v1675
    %v2020 = vunpack.c.h.b16 %v1675
    %v2021 = vunpack.c.l.b16 %v1676
    %v2022 = vunpack.c.h.b16 %v1676
    %v2023 = vunpack.c.l.b16 %v1677
    %v2024 = vunpack.c.h.b16 %v1677
    %v2025 = vunpack.c.l.b16 %v1678
    %v2026 = vunpack.c.h.b16 %v1678
    %v2027 = vunpack.c.l.b16 %v1679
    %v2028 = vunpack.c.h.b16 %v1679
    %v2029 = vunpack.c.l.b16 %v1680
    %v2030 = vunpack.c.h.b16 %v1680
    %v2031 = vunpack.c.l.b16 %v1681
    %v2032 = vunpack.c.h.b16 %v1681
    %v2033 = vunpack.c.l.b16 %v1682
    %v2034 = vunpack.c.h.b16 %v1682
    %v2035 = vunpack.c.l.b16 %v1683
    %v2036 = vunpack.c.h.b16 %v1683
    %v2037 = vunpack.c.l.b16 %v1684
    %v2038 = vunpack.c.h.b16 %v1684
    %v2039 = vunpack.c.l.b16 %v1685
    %v2040 = vunpack.c.h.b16 %v1685
    %v2041 = vunpack.c.l.b16 %v1686
    %v2042 = vunpack.c.h.b16 %v1686
    %v2043 = vunpack.c.l.b16 %v1687
    %v2044 = vunpack.c.h.b16 %v1687
    %v2045 = vunpack.c.l.b16 %v1688
    %v2046 = vunpack.c.h.b16 %v1688
    %v2047 = vunpack.c.l.b16 %v1689
    %v2048 = vunpack.c.h.b16 %v1689
    %v2049 = vunpack.c.l.b16 %v1690
    %v2050 = vunpack.c.h.b16 %v1690
    %v2051 = vunpack.c.l.b16 %v1691
    %v2052 = vunpack.c.h.b16 %v1691
    %v2053 = vunpack.c.l.b16 %v1692
    %v2054 = vunpack.c.h.b16 %v1692
    %v2055 = vunpack.c.l.b16 %v1693
    %v2056 = vunpack.c.h.b16 %v1693
    %v2057 = vunpack.c.l.b16 %v1694
    %v2058 = vunpack.c.h.b16 %v1694
    %v2059 = vunpack.c.l.b16 %v1695
    %v2060 = vunpack.c.h.b16 %v1695
    %v2061 = vunpack.c.l.b16 %v1696
    %v2062 = vunpack.c.h.b16 %v1696
    %v2063 = vunpack.c.l.b16 %v1697
    %v2064 = vunpack.c.h.b16 %v1697
    %v2065 = vunpack.c.l.b16 %v1698
    %v2066 = vunpack.c.h.b16 %v1698
    %v2067 = vunpack.c.l.b16 %v1699
    %v2068 = vunpack.c.h.b16 %v1699
    %v2069 = vunpack.c.l.b16 %v1700
    %v2070 = vunpack.c.h.b16 %v1700
    %v2071 = vunpack.c.l.b16 %v1701
    %v2072 = vunpack.c.h.b16 %v1701
    %v2073 = vunpack.c.l.b16 %v1702
    %v2074 = vunpack.c.h.b16 %v1702
    %v2075 = vunpack.c.l.b16 %v1703
    %v2076 = vunpack.c.h.b16 %v1703
    %v2077 = vunpack.c.l.b16 %v1704
    %v2078 = vunpack.c.h.b16 %v1704
    %v2079 = vunpack.c.l.b16 %v1705
    %v2080 = vunpack.c.h.b16 %v1705
    %v2081 = vunpack.c.l.b16 %v1706
    %v2082 = vunpack.c.h.b16 %v1706
    %v2083 = vunpack.c.l.b16 %v1707
    %v2084 = vunpack.c.h.b16 %v1707
    %v2085 = vunpack.c.l.b16 %v1708
    %v2086 = vunpack.c.h.b16 %v1708
    %v2087 = vunpack.c.l.b16 %v1709
    %v2088 = vunpack.c.h.b16 %v1709
    %v2089 = vunpack.c.l.b16 %v1710
    %v2090 = vunpack.c.h.b16 %v1710
    %v2091 = vunpack.c.l.b16 %v1711
    %v2092 = vunpack.c.h.b16 %v1711
    %v2093 = vunpack.c.l.b16 %v1712
    %v2094 = vunpack.c.h.b16 %v1712
    %v2095 = vunpack.c.l.b16 %v1713
    %v2096 = vunpack.c.h.b16 %v1713
    %v2097 = vunpack.c.l.b16 %v1714
    %v2098 = vunpack.c.h.b16 %v1714
    %v2099 = vunpack.c.l.b16 %v1715
    %v2100 = vunpack.c.h.b16 %v1715
    %v2101 = vunpack.c.l.b16 %v1716
    %v2102 = vunpack.c.h.b16 %v1716
    %v2103 = vunpack.c.l.b16 %v1717
    %v2104 = vunpack.c.h.b16 %v1717
    %v2105 = vunpack.c.l.b16 %v1718
    %v2106 = vunpack.c.h.b16 %v1718
    %v2107 = vunpack.c.l.b16 %v1719
    %v2108 = vunpack.c.h.b16 %v1719
    %v2109 = vunpack.c.l.b16 %v1720
    %v2110 = vunpack.c.h.b16 %v1720
    %v2111 = vunpack.c.l.b16 %v1721
    %v2112 = vunpack.c.h.b16 %v1721
    %v2113 = vunpack.c.l.b16 %v1722
    %v2114 = vunpack.c.h.b16 %v1722
    %v2115 = vunpack.c.l.b16 %v1723
    %v2116 = vunpack.c.h.b16 %v1723
    %v2117 = vunpack.c.l.b16 %v1724
    %v2118 = vunpack.c.h.b16 %v1724
    %v2119 = vpack.c.b16 %v1867, %v1863
    %v2120 = vpack.c.b16 %v1868, %v1864
    %v2121 = vpack.c.b16 %v1869, %v1865
    %v2122 = vpack.c.b16 %v1870, %v1866
    %v2123 = vpack.c.b16 %v1875, %v1871
    %v2124 = vpack.c.b16 %v1876, %v1872
    %v2125 = vpack.c.b16 %v1877, %v1873
    %v2126 = vpack.c.b16 %v1878, %v1874
    %v2127 = vpack.c.b16 %v1883, %v1879
    %v2128 = vpack.c.b16 %v1884, %v1880
    %v2129 = vpack.c.b16 %v1885, %v1881
    %v2130 = vpack.c.b16 %v1886, %v1882
    %v2131 = vpack.c.b16 %v1891, %v1887
    %v2132 = vpack.c.b16 %v1892, %v1888
    %v2133 = vpack.c.b16 %v1893, %v1889
    %v2134 = vpack.c.b16 %v1894, %v1890
    %v2135 = vpack.c.b16 %v1899, %v1895
    %v2136 = vpack.c.b16 %v1900, %v1896
    %v2137 = vpack.c.b16 %v1901, %v1897
    %v2138 = vpack.c.b16 %v1902, %v1898
    %v2139 = vpack.c.b16 %v1907, %v1903
    %v2140 = vpack.c.b16 %v1908, %v1904
    %v2141 = vpack.c.b16 %v1909, %v1905
    %v2142 = vpack.c.b16 %v1910, %v1906
    %v2143 = vpack.c.b16 %v1915, %v1911
    %v2144 = vpack.c.b16 %v1916, %v1912
    %v2145 = vpack.c.b16 %v1917, %v1913
    %v2146 = vpack.c.b16 %v1918, %v1914
    %v2147 = vpack.c.b16 %v1923, %v1919
    %v2148 = vpack.c.b16 %v1924, %v1920
    %v2149 = vpack.c.b16 %v1925, %v1921
    %v2150 = vpack.c.b16 %v1926, %v1922
    %v2151 = vpack.c.b16 %v1931, %v1927
    %v2152 = vpack.c.b16 %v1932, %v1928
    %v2153 = vpack.c.b16 %v1933, %v1929
    %v2154 = vpack.c.b16 %v1934, %v1930
    %v2155 = vpack.c.b16 %v1939, %v1935
    %v2156 = vpack.c.b16 %v1940, %v1936
    %v2157 = vpack.c.b16 %v1941, %v1937
    %v2158 = vpack.c.b16 %v1942, %v1938
    %v2159 = vpack.c.b16 %v1947, %v1943
    %v2160 = vpack.c.b16 %v1948, %v1944
    %v2161 = vpack.c.b16 %v1949, %v1945
    %v2162 = vpack.c.b16 %v1950, %v1946
    %v2163 = vpack.c.b16 %v1955, %v1951
    %v2164 = vpack.c.b16 %v1956, %v1952
    %v2165 = vpack.c.b16 %v1957, %v1953
    %v2166 = vpack.c.b16 %v1958, %v1954
    %v2167 = vpack.c.b16 %v1963, %v1959
    %v2168 = vpack.c.b16 %v1964, %v1960
    %v2169 = vpack.c.b16 %v1965, %v1961
    %v2170 = vpack.c.b16 %v1966, %v1962
    %v2171 = vpack.c.b16 %v1971, %v1967
    %v2172 = vpack.c.b16 %v1972, %v1968
    %v2173 = vpack.c.b16 %v1973, %v1969
    %v2174 = vpack.c.b16 %v1974, %v1970
    %v2175 = vpack.c.b16 %v1979, %v1975
    %v2176 = vpack.c.b16 %v1980, %v1976
    %v2177 = vpack.c.b16 %v1981, %v1977
    %v2178 = vpack.c.b16 %v1982, %v1978
    %v2179 = vpack.c.b16 %v1987, %v1983
    %v2180 = vpack.c.b16 %v1988, %v1984
    %v2181 = vpack.c.b16 %v1989, %v1985
    %v2182 = vpack.c.b16 %v1990, %v1986
    %v2183 = vpack.c.b16 %v1995, %v1991
    %v2184 = vpack.c.b16 %v1996, %v1992
    %v2185 = vpack.c.b16 %v1997, %v1993
    %v2186 = vpack.c.b16 %v1998, %v1994
    %v2187 = vpack.c.b16 %v2003, %v1999
    %v2188 = vpack.c.b16 %v2004, %v2000
    %v2189 = vpack.c.b16 %v2005, %v2001
    %v2190 = vpack.c.b16 %v2006, %v2002
    %v2191 = vpack.c.b16 %v2011, %v2007
    %v2192 = vpack.c.b16 %v2012, %v2008
    %v2193 = vpack.c.b16 %v2013, %v2009
    %v2194 = vpack.c.b16 %v2014, %v2010
    %v2195 = vpack.c.b16 %v2019, %v2015
    %v2196 = vpack.c.b16 %v2020, %v2016
    %v2197 = vpack.c.b16 %v2021, %v2017
    %v2198 = vpack.c.b16 %v2022, %v2018
    %v2199 = vpack.c.b16 %v2027, %v2023
    %v2200 = vpack.c.b16 %v2028, %v2024
    %v2201 = vpack.c.b16 %v2029, %v2025
    %v2202 = vpack.c.b16 %v2030, %v2026
    %v2203 = vpack.c.b16 %v2035, %v2031
    %v2204 = vpack.c.b16 %v2036, %v2032
    %v2205 = vpack.c.b16 %v2037, %v2033
    %v2206 = vpack.c.b16 %v2038, %v2034
    %v2207 = vpack.c.b16 %v2043, %v2039
    %v2208 = vpack.c.b16 %v2044, %v2040
    %v2209 = vpack.c.b16 %v2045, %v2041
    %v2210 = vpack.c.b16 %v2046, %v2042
    %v2211 = vpack.c.b16 %v2051, %v2047
    %v2212 = vpack.c.b16 %v2052, %v2048
    %v2213 = vpack.c.b16 %v2053, %v2049
    %v2214 = vpack.c.b16 %v2054, %v2050
    %v2215 = vpack.c.b16 %v2059, %v2055
    %v2216 = vpack.c.b16 %v2060, %v2056
    %v2217 = vpack.c.b16 %v2061, %v2057
    %v2218 = vpack.c.b16 %v2062, %v2058
    %v2219 = vpack.c.b16 %v2067, %v2063
    %v2220 = vpack.c.b16 %v2068, %v2064
    %v2221 = vpack.c.b16 %v2069, %v2065
    %v2222 = vpack.c.b16 %v2070, %v2066
    %v2223 = vpack.c.b16 %v2075, %v2071
    %v2224 = vpack.c.b16 %v2076, %v2072
    %v2225 = vpack.c.b16 %v2077, %v2073
    %v2226 = vpack.c.b16 %v2078, %v2074
    %v2227 = vpack.c.b16 %v2083, %v2079
    %v2228 = vpack.c.b16 %v2084, %v2080
    %v2229 = vpack.c.b16 %v2085, %v2081
    %v2230 = vpack.c.b16 %v2086, %v2082
    %v2231 = vpack.c.b16 %v2091, %v2087
    %v2232 = vpack.c.b16 %v2092, %v2088
    %v2233 = vpack.c.b16 %v2093, %v2089
    %v2234 = vpack.c.b16 %v2094, %v2090
    %v2235 = vpack.c.b16 %v2099, %v2095
    %v2236 = vpack.c.b16 %v2100, %v2096
    %v2237 = vpack.c.b16 %v2101, %v2097
    %v2238 = vpack.c.b16 %v2102, %v2098
    %v2239 = vpack.c.b16 %v2107, %v2103
    %v2240 = vpack.c.b16 %v2108, %v2104
    %v2241 = vpack.c.b16 %v2109, %v2105
    %v2242 = vpack.c.b16 %v2110, %v2106
    %v2243 = vpack.c.b16 %v2115, %v2111
    %v2244 = vpack.c.b16 %v2116, %v2112
    %v2245 = vpack.c.b16 %v2117, %v2113
    %v2246 = vpack.c.b16 %v2118, %v2114
    %2375 = vmatpush.bf16.msra.mxu0 %v2147
    %2376 = vmatpush.bf16.msra.mxu0 %v2143
    %2377 = vmatpush.bf16.msra.mxu0 %v2139
    %2378 = vmatpush.bf16.msra.mxu0 %v2135
    %2379 = vmatpush.bf16.msra.mxu0 %v2131
    %2380 = vmatpush.bf16.msra.mxu0 %v2127
    %2381 = vmatpush.bf16.msra.mxu0 %v2123
    %2382 = vmatpush.bf16.msra.mxu0 %v2119
    %2383 = vmatmul.bf16.gmra.mxu0 %v1593
    %v2384 = vpop.f32.mrf.mxu0
    %v2385 = vadd.f32 %v1727, %v2384
    %v2386 = vpop.f32.mrf.mxu0
    %2387 = vdwg.mxu0
    %2388 = vmatpush.bf16.msra.mxu0 %v2179
    %2389 = vmatpush.bf16.msra.mxu0 %v2175
    %2390 = vmatpush.bf16.msra.mxu0 %v2171
    %2391 = vmatpush.bf16.msra.mxu0 %v2167
    %2392 = vmatpush.bf16.msra.mxu0 %v2163
    %2393 = vmatpush.bf16.msra.mxu0 %v2159
    %2394 = vmatpush.bf16.msra.mxu0 %v2155
    %2395 = vmatpush.bf16.msra.mxu0 %v2151
    %2396 = vmatmul.bf16.gmra.mxu0 %v1594
    %v2397 = vpop.f32.mrf.mxu0
    %v2398 = vadd.f32 %v2385, %v2397
    %v2399 = vpop.f32.mrf.mxu0
    %2400 = vdwg.mxu0
    %2401 = vmatpush.bf16.msra.mxu0 %v2211
    %2402 = vmatpush.bf16.msra.mxu0 %v2207
    %2403 = vmatpush.bf16.msra.mxu0 %v2203
    %2404 = vmatpush.bf16.msra.mxu0 %v2199
    %2405 = vmatpush.bf16.msra.mxu0 %v2195
    %2406 = vmatpush.bf16.msra.mxu0 %v2191
    %2407 = vmatpush.bf16.msra.mxu0 %v2187
    %2408 = vmatpush.bf16.msra.mxu0 %v2183
    %2409 = vmatmul.bf16.gmra.mxu0 %v1595
    %v2410 = vpop.f32.mrf.mxu0
    %v2411 = vadd.f32 %v2398, %v2410
    %v2412 = vpop.f32.mrf.mxu0
    %2413 = vdwg.mxu0
    %2414 = vmatpush.bf16.msra.mxu0 %v2243
    %2415 = vmatpush.bf16.msra.mxu0 %v2239
    %2416 = vmatpush.bf16.msra.mxu0 %v2235
    %2417 = vmatpush.bf16.msra.mxu0 %v2231
    %2418 = vmatpush.bf16.msra.mxu0 %v2227
    %2419 = vmatpush.bf16.msra.mxu0 %v2223
    %2420 = vmatpush.bf16.msra.mxu0 %v2219
    %2421 = vmatpush.bf16.msra.mxu0 %v2215
    %2422 = vmatmul.bf16.gmra.mxu0 %v1596
    %v2423 = vpop.f32.mrf.mxu0
    %v2424 = vadd.f32 %v2411, %v2423
    %v2425 = vpop.f32.mrf.mxu0
    %2426 = vdwg.mxu0
    %2427 = vmatpush.bf16.msra.mxu0 %v2148
    %2428 = vmatpush.bf16.msra.mxu0 %v2144
    %2429 = vmatpush.bf16.msra.mxu0 %v2140
    %2430 = vmatpush.bf16.msra.mxu0 %v2136
    %2431 = vmatpush.bf16.msra.mxu0 %v2132
    %2432 = vmatpush.bf16.msra.mxu0 %v2128
    %2433 = vmatpush.bf16.msra.mxu0 %v2124
    %2434 = vmatpush.bf16.msra.mxu0 %v2120
    %2435 = vmatmul.bf16.gmra.mxu0 %v1593
    %v2436 = vpop.f32.mrf.mxu0
    %v2437 = vadd.f32 %v1728, %v2436
    %v2438 = vpop.f32.mrf.mxu0
    %2439 = vdwg.mxu0
    %2440 = vmatpush.bf16.msra.mxu0 %v2180
    %2441 = vmatpush.bf16.msra.mxu0 %v2176
    %2442 = vmatpush.bf16.msra.mxu0 %v2172
    %2443 = vmatpush.bf16.msra.mxu0 %v2168
    %2444 = vmatpush.bf16.msra.mxu0 %v2164
    %2445 = vmatpush.bf16.msra.mxu0 %v2160
    %2446 = vmatpush.bf16.msra.mxu0 %v2156
    %2447 = vmatpush.bf16.msra.mxu0 %v2152
    %2448 = vmatmul.bf16.gmra.mxu0 %v1594
    %v2449 = vpop.f32.mrf.mxu0
    %v2450 = vadd.f32 %v2437, %v2449
    %v2451 = vpop.f32.mrf.mxu0
    %2452 = vdwg.mxu0
    %2453 = vmatpush.bf16.msra.mxu0 %v2212
    %2454 = vmatpush.bf16.msra.mxu0 %v2208
    %2455 = vmatpush.bf16.msra.mxu0 %v2204
    %2456 = vmatpush.bf16.msra.mxu0 %v2200
    %2457 = vmatpush.bf16.msra.mxu0 %v2196
    %2458 = vmatpush.bf16.msra.mxu0 %v2192
    %2459 = vmatpush.bf16.msra.mxu0 %v2188
    %2460 = vmatpush.bf16.msra.mxu0 %v2184
    %2461 = vmatmul.bf16.gmra.mxu0 %v1595
    %v2462 = vpop.f32.mrf.mxu0
    %v2463 = vadd.f32 %v2450, %v2462
    %v2464 = vpop.f32.mrf.mxu0
    %2465 = vdwg.mxu0
    %2466 = vmatpush.bf16.msra.mxu0 %v2244
    %2467 = vmatpush.bf16.msra.mxu0 %v2240
    %2468 = vmatpush.bf16.msra.mxu0 %v2236
    %2469 = vmatpush.bf16.msra.mxu0 %v2232
    %2470 = vmatpush.bf16.msra.mxu0 %v2228
    %2471 = vmatpush.bf16.msra.mxu0 %v2224
    %2472 = vmatpush.bf16.msra.mxu0 %v2220
    %2473 = vmatpush.bf16.msra.mxu0 %v2216
    %2474 = vmatmul.bf16.gmra.mxu0 %v1596
    %v2475 = vpop.f32.mrf.mxu0
    %v2476 = vadd.f32 %v2463, %v2475
    %v2477 = vpop.f32.mrf.mxu0
    %2478 = vdwg.mxu0
    %2479 = vmatpush.bf16.msra.mxu0 %v2149
    %2480 = vmatpush.bf16.msra.mxu0 %v2145
    %2481 = vmatpush.bf16.msra.mxu0 %v2141
    %2482 = vmatpush.bf16.msra.mxu0 %v2137
    %2483 = vmatpush.bf16.msra.mxu0 %v2133
    %2484 = vmatpush.bf16.msra.mxu0 %v2129
    %2485 = vmatpush.bf16.msra.mxu0 %v2125
    %2486 = vmatpush.bf16.msra.mxu0 %v2121
    %2487 = vmatmul.bf16.gmra.mxu0 %v1593
    %v2488 = vpop.f32.mrf.mxu0
    %v2489 = vadd.f32 %v1729, %v2488
    %v2490 = vpop.f32.mrf.mxu0
    %2491 = vdwg.mxu0
    %2492 = vmatpush.bf16.msra.mxu0 %v2181
    %2493 = vmatpush.bf16.msra.mxu0 %v2177
    %2494 = vmatpush.bf16.msra.mxu0 %v2173
    %2495 = vmatpush.bf16.msra.mxu0 %v2169
    %2496 = vmatpush.bf16.msra.mxu0 %v2165
    %2497 = vmatpush.bf16.msra.mxu0 %v2161
    %2498 = vmatpush.bf16.msra.mxu0 %v2157
    %2499 = vmatpush.bf16.msra.mxu0 %v2153
    %2500 = vmatmul.bf16.gmra.mxu0 %v1594
    %v2501 = vpop.f32.mrf.mxu0
    %v2502 = vadd.f32 %v2489, %v2501
    %v2503 = vpop.f32.mrf.mxu0
    %2504 = vdwg.mxu0
    %2505 = vmatpush.bf16.msra.mxu0 %v2213
    %2506 = vmatpush.bf16.msra.mxu0 %v2209
    %2507 = vmatpush.bf16.msra.mxu0 %v2205
    %2508 = vmatpush.bf16.msra.mxu0 %v2201
    %2509 = vmatpush.bf16.msra.mxu0 %v2197
    %2510 = vmatpush.bf16.msra.mxu0 %v2193
    %2511 = vmatpush.bf16.msra.mxu0 %v2189
    %2512 = vmatpush.bf16.msra.mxu0 %v2185
    %2513 = vmatmul.bf16.gmra.mxu0 %v1595
    %v2514 = vpop.f32.mrf.mxu0
    %v2515 = vadd.f32 %v2502, %v2514
    %v2516 = vpop.f32.mrf.mxu0
    %2517 = vdwg.mxu0
    %2518 = vmatpush.bf16.msra.mxu0 %v2245
    %2519 = vmatpush.bf16.msra.mxu0 %v2241
    %2520 = vmatpush.bf16.msra.mxu0 %v2237
    %2521 = vmatpush.bf16.msra.mxu0 %v2233
    %2522 = vmatpush.bf16.msra.mxu0 %v2229
    %2523 = vmatpush.bf16.msra.mxu0 %v2225
    %2524 = vmatpush.bf16.msra.mxu0 %v2221
    %2525 = vmatpush.bf16.msra.mxu0 %v2217
    %2526 = vmatmul.bf16.gmra.mxu0 %v1596
    %v2527 = vpop.f32.mrf.mxu0
    %v2528 = vadd.f32 %v2515, %v2527
    %v2529 = vpop.f32.mrf.mxu0
    %2530 = vdwg.mxu0
    %2531 = vmatpush.bf16.msra.mxu0 %v2150
    %2532 = vmatpush.bf16.msra.mxu0 %v2146
    %2533 = vmatpush.bf16.msra.mxu0 %v2142
    %2534 = vmatpush.bf16.msra.mxu0 %v2138
    %2535 = vmatpush.bf16.msra.mxu0 %v2134
    %2536 = vmatpush.bf16.msra.mxu0 %v2130
    %2537 = vmatpush.bf16.msra.mxu0 %v2126
    %2538 = vmatpush.bf16.msra.mxu0 %v2122
    %2539 = vmatmul.bf16.gmra.mxu0 %v1593
    %v2540 = vpop.f32.mrf.mxu0
    %v2541 = vadd.f32 %v1730, %v2540
    %v2542 = vpop.f32.mrf.mxu0
    %2543 = vdwg.mxu0
    %2544 = vmatpush.bf16.msra.mxu0 %v2182
    %2545 = vmatpush.bf16.msra.mxu0 %v2178
    %2546 = vmatpush.bf16.msra.mxu0 %v2174
    %2547 = vmatpush.bf16.msra.mxu0 %v2170
    %2548 = vmatpush.bf16.msra.mxu0 %v2166
    %2549 = vmatpush.bf16.msra.mxu0 %v2162
    %2550 = vmatpush.bf16.msra.mxu0 %v2158
    %2551 = vmatpush.bf16.msra.mxu0 %v2154
    %2552 = vmatmul.bf16.gmra.mxu0 %v1594
    %v2553 = vpop.f32.mrf.mxu0
    %v2554 = vadd.f32 %v2541, %v2553
    %v2555 = vpop.f32.mrf.mxu0
    %2556 = vdwg.mxu0
    %2557 = vmatpush.bf16.msra.mxu0 %v2214
    %2558 = vmatpush.bf16.msra.mxu0 %v2210
    %2559 = vmatpush.bf16.msra.mxu0 %v2206
    %2560 = vmatpush.bf16.msra.mxu0 %v2202
    %2561 = vmatpush.bf16.msra.mxu0 %v2198
    %2562 = vmatpush.bf16.msra.mxu0 %v2194
    %2563 = vmatpush.bf16.msra.mxu0 %v2190
    %2564 = vmatpush.bf16.msra.mxu0 %v2186
    %2565 = vmatmul.bf16.gmra.mxu0 %v1595
    %v2566 = vpop.f32.mrf.mxu0
    %v2567 = vadd.f32 %v2554, %v2566
    %v2568 = vpop.f32.mrf.mxu0
    %2569 = vdwg.mxu0
    %2570 = vmatpush.bf16.msra.mxu0 %v2246
    %2571 = vmatpush.bf16.msra.mxu0 %v2242
    %2572 = vmatpush.bf16.msra.mxu0 %v2238
    %2573 = vmatpush.bf16.msra.mxu0 %v2234
    %2574 = vmatpush.bf16.msra.mxu0 %v2230
    %2575 = vmatpush.bf16.msra.mxu0 %v2226
    %2576 = vmatpush.bf16.msra.mxu0 %v2222
    %2577 = vmatpush.bf16.msra.mxu0 %v2218
    %2578 = vmatmul.bf16.gmra.mxu0 %v1596
    %v2579 = vpop.f32.mrf.mxu0
    %v2580 = vadd.f32 %v2567, %v2579
    %v2581 = vpop.f32.mrf.mxu0
    %2582 = vdwg.mxu0
    %vm2583 = vcmp.gt.f32.partialorder %v2424, 0.0
    %vm2584 = vcmp.gt.f32.partialorder %v2476, 0.0
    %vm2585 = vcmp.gt.f32.partialorder %v2528, 0.0
    %vm2586 = vcmp.gt.f32.partialorder %v2580, 0.0
    %v2587 = vmul.f32 %v2424, 0.2
    %v2588 = vmul.f32 %v2476, 0.2
    %v2589 = vmul.f32 %v2528, 0.2
    %v2590 = vmul.f32 %v2580, 0.2
    %v2591 = vsel %vm2583, %v2424, %v2587
    %v2592 = vsel %vm2584, %v2476, %v2588
    %v2593 = vsel %vm2585, %v2528, %v2589
    %v2594 = vsel %vm2586, %v2580, %v2590
    %v2595 = vpack.c.bf16 %v2591, %v2591
    %v2596 = vpack.c.bf16 %v2592, %v2592
    %v2597 = vpack.c.bf16 %v2593, %v2593
    %v2598 = vpack.c.bf16 %v2594, %v2594
    %v2599 = vld [vmem:[#allocation6] sm:$0xf]
    %v2600 = vld [vmem:[#allocation6 + $0x4] sm:$0xf]
    %v2601 = vld [vmem:[#allocation6 + $0x8] sm:$0xf]
    %v2602 = vld [vmem:[#allocation6 + $0xc] sm:$0xf]
    %v2603 = vld [vmem:[#allocation6 + $0x10] sm:$0xf]
    %v2604 = vld [vmem:[#allocation6 + $0x14] sm:$0xf]
    %v2605 = vld [vmem:[#allocation6 + $0x18] sm:$0xf]
    %v2606 = vld [vmem:[#allocation6 + $0x1c] sm:$0xf]
    %v2607 = vld [vmem:[#allocation6 + $0x20] sm:$0xf]
    %v2608 = vld [vmem:[#allocation6 + $0x24] sm:$0xf]
    %v2609 = vld [vmem:[#allocation6 + $0x28] sm:$0xf]
    %v2610 = vld [vmem:[#allocation6 + $0x2c] sm:$0xf]
    %v2611 = vld [vmem:[#allocation6 + $0x30] sm:$0xf]
    %v2612 = vld [vmem:[#allocation6 + $0x34] sm:$0xf]
    %v2613 = vld [vmem:[#allocation6 + $0x38] sm:$0xf]
    %v2614 = vld [vmem:[#allocation6 + $0x3c] sm:$0xf]
    %v2615 = vld [vmem:[#allocation6 + $0x40] sm:$0xf]
    %v2616 = vld [vmem:[#allocation6 + $0x44] sm:$0xf]
    %v2617 = vld [vmem:[#allocation6 + $0x48] sm:$0xf]
    %v2618 = vld [vmem:[#allocation6 + $0x4c] sm:$0xf]
    %v2619 = vld [vmem:[#allocation6 + $0x50] sm:$0xf]
    %v2620 = vld [vmem:[#allocation6 + $0x54] sm:$0xf]
    %v2621 = vld [vmem:[#allocation6 + $0x58] sm:$0xf]
    %v2622 = vld [vmem:[#allocation6 + $0x5c] sm:$0xf]
    %v2623 = vld [vmem:[#allocation6 + $0x60] sm:$0xf]
    %v2624 = vld [vmem:[#allocation6 + $0x64] sm:$0xf]
    %v2625 = vld [vmem:[#allocation6 + $0x68] sm:$0xf]
    %v2626 = vld [vmem:[#allocation6 + $0x6c] sm:$0xf]
    %v2627 = vld [vmem:[#allocation6 + $0x70] sm:$0xf]
    %v2628 = vld [vmem:[#allocation6 + $0x74] sm:$0xf]
    %v2629 = vld [vmem:[#allocation6 + $0x78] sm:$0xf]
    %v2630 = vld [vmem:[#allocation6 + $0x7c] sm:$0xf]
    %v2631 = vld [vmem:[#allocation6 + $0x80] sm:$0xf]
    %v2632 = vld [vmem:[#allocation6 + $0x84] sm:$0xf]
    %v2633 = vld [vmem:[#allocation6 + $0x88] sm:$0xf]
    %v2634 = vld [vmem:[#allocation6 + $0x8c] sm:$0xf]
    %v2635 = vld [vmem:[#allocation6 + $0x90] sm:$0xf]
    %v2636 = vld [vmem:[#allocation6 + $0x94] sm:$0xf]
    %v2637 = vld [vmem:[#allocation6 + $0x98] sm:$0xf]
    %v2638 = vld [vmem:[#allocation6 + $0x9c] sm:$0xf]
    %v2639 = vld [vmem:[#allocation6 + $0xa0] sm:$0xf]
    %v2640 = vld [vmem:[#allocation6 + $0xa4] sm:$0xf]
    %v2641 = vld [vmem:[#allocation6 + $0xa8] sm:$0xf]
    %v2642 = vld [vmem:[#allocation6 + $0xac] sm:$0xf]
    %v2643 = vld [vmem:[#allocation6 + $0xb0] sm:$0xf]
    %v2644 = vld [vmem:[#allocation6 + $0xb4] sm:$0xf]
    %v2645 = vld [vmem:[#allocation6 + $0xb8] sm:$0xf]
    %v2646 = vld [vmem:[#allocation6 + $0xbc] sm:$0xf]
    %v2647 = vld [vmem:[#allocation6 + $0xc0] sm:$0xf]
    %v2648 = vld [vmem:[#allocation6 + $0xc4] sm:$0xf]
    %v2649 = vld [vmem:[#allocation6 + $0xc8] sm:$0xf]
    %v2650 = vld [vmem:[#allocation6 + $0xcc] sm:$0xf]
    %v2651 = vld [vmem:[#allocation6 + $0xd0] sm:$0xf]
    %v2652 = vld [vmem:[#allocation6 + $0xd4] sm:$0xf]
    %v2653 = vld [vmem:[#allocation6 + $0xd8] sm:$0xf]
    %v2654 = vld [vmem:[#allocation6 + $0xdc] sm:$0xf]
    %v2655 = vld [vmem:[#allocation6 + $0xe0] sm:$0xf]
    %v2656 = vld [vmem:[#allocation6 + $0xe4] sm:$0xf]
    %v2657 = vld [vmem:[#allocation6 + $0xe8] sm:$0xf]
    %v2658 = vld [vmem:[#allocation6 + $0xec] sm:$0xf]
    %v2659 = vld [vmem:[#allocation6 + $0xf0] sm:$0xf]
    %v2660 = vld [vmem:[#allocation6 + $0xf4] sm:$0xf]
    %v2661 = vld [vmem:[#allocation6 + $0xf8] sm:$0xf]
    %v2662 = vld [vmem:[#allocation6 + $0xfc] sm:$0xf]
    %v2663 = vld [vmem:[%s8] sm:$0x1]
    %v2665 = vperm.slane %v2663, 0
    %v2731 = vunpack.c.l.b16 %v2599
    %v2732 = vunpack.c.l.b16 %v2600
    %v2733 = vunpack.c.l.b16 %v2601
    %v2734 = vunpack.c.l.b16 %v2602
    %v2735 = vunpack.c.l.b16 %v2603
    %v2736 = vunpack.c.l.b16 %v2604
    %v2737 = vunpack.c.l.b16 %v2605
    %v2738 = vunpack.c.l.b16 %v2606
    %v2739 = vunpack.c.l.b16 %v2607
    %v2740 = vunpack.c.l.b16 %v2608
    %v2741 = vunpack.c.l.b16 %v2609
    %v2742 = vunpack.c.l.b16 %v2610
    %v2743 = vunpack.c.l.b16 %v2611
    %v2744 = vunpack.c.l.b16 %v2612
    %v2745 = vunpack.c.l.b16 %v2613
    %v2746 = vunpack.c.l.b16 %v2614
    %v2747 = vunpack.c.l.b16 %v2615
    %v2748 = vunpack.c.l.b16 %v2616
    %v2749 = vunpack.c.l.b16 %v2617
    %v2750 = vunpack.c.l.b16 %v2618
    %v2751 = vunpack.c.l.b16 %v2619
    %v2752 = vunpack.c.l.b16 %v2620
    %v2753 = vunpack.c.l.b16 %v2621
    %v2754 = vunpack.c.l.b16 %v2622
    %v2755 = vunpack.c.l.b16 %v2623
    %v2756 = vunpack.c.l.b16 %v2624
    %v2757 = vunpack.c.l.b16 %v2625
    %v2758 = vunpack.c.l.b16 %v2626
    %v2759 = vunpack.c.l.b16 %v2627
    %v2760 = vunpack.c.l.b16 %v2628
    %v2761 = vunpack.c.l.b16 %v2629
    %v2762 = vunpack.c.l.b16 %v2630
    %v2763 = vunpack.c.l.b16 %v2631
    %v2764 = vunpack.c.l.b16 %v2632
    %v2765 = vunpack.c.l.b16 %v2633
    %v2766 = vunpack.c.l.b16 %v2634
    %v2767 = vunpack.c.l.b16 %v2635
    %v2768 = vunpack.c.l.b16 %v2636
    %v2769 = vunpack.c.l.b16 %v2637
    %v2770 = vunpack.c.l.b16 %v2638
    %v2771 = vunpack.c.l.b16 %v2639
    %v2772 = vunpack.c.l.b16 %v2640
    %v2773 = vunpack.c.l.b16 %v2641
    %v2774 = vunpack.c.l.b16 %v2642
    %v2775 = vunpack.c.l.b16 %v2643
    %v2776 = vunpack.c.l.b16 %v2644
    %v2777 = vunpack.c.l.b16 %v2645
    %v2778 = vunpack.c.l.b16 %v2646
    %v2779 = vunpack.c.l.b16 %v2647
    %v2780 = vunpack.c.l.b16 %v2648
    %v2781 = vunpack.c.l.b16 %v2649
    %v2782 = vunpack.c.l.b16 %v2650
    %v2783 = vunpack.c.l.b16 %v2651
    %v2784 = vunpack.c.l.b16 %v2652
    %v2785 = vunpack.c.l.b16 %v2653
    %v2786 = vunpack.c.l.b16 %v2654
    %v2787 = vunpack.c.l.b16 %v2655
    %v2788 = vunpack.c.l.b16 %v2656
    %v2789 = vunpack.c.l.b16 %v2657
    %v2790 = vunpack.c.l.b16 %v2658
    %v2791 = vunpack.c.l.b16 %v2659
    %v2792 = vunpack.c.l.b16 %v2660
    %v2793 = vunpack.c.l.b16 %v2661
    %v2794 = vunpack.c.l.b16 %v2662
    %v2795 = vpack.c.b16 %v2732, %v2731
    %v2796 = vpack.c.b16 %v2734, %v2733
    %v2797 = vpack.c.b16 %v2736, %v2735
    %v2798 = vpack.c.b16 %v2738, %v2737
    %v2799 = vpack.c.b16 %v2740, %v2739
    %v2800 = vpack.c.b16 %v2742, %v2741
    %v2801 = vpack.c.b16 %v2744, %v2743
    %v2802 = vpack.c.b16 %v2746, %v2745
    %v2803 = vpack.c.b16 %v2748, %v2747
    %v2804 = vpack.c.b16 %v2750, %v2749
    %v2805 = vpack.c.b16 %v2752, %v2751
    %v2806 = vpack.c.b16 %v2754, %v2753
    %v2807 = vpack.c.b16 %v2756, %v2755
    %v2808 = vpack.c.b16 %v2758, %v2757
    %v2809 = vpack.c.b16 %v2760, %v2759
    %v2810 = vpack.c.b16 %v2762, %v2761
    %v2811 = vpack.c.b16 %v2764, %v2763
    %v2812 = vpack.c.b16 %v2766, %v2765
    %v2813 = vpack.c.b16 %v2768, %v2767
    %v2814 = vpack.c.b16 %v2770, %v2769
    %v2815 = vpack.c.b16 %v2772, %v2771
    %v2816 = vpack.c.b16 %v2774, %v2773
    %v2817 = vpack.c.b16 %v2776, %v2775
    %v2818 = vpack.c.b16 %v2778, %v2777
    %v2819 = vpack.c.b16 %v2780, %v2779
    %v2820 = vpack.c.b16 %v2782, %v2781
    %v2821 = vpack.c.b16 %v2784, %v2783
    %v2822 = vpack.c.b16 %v2786, %v2785
    %v2823 = vpack.c.b16 %v2788, %v2787
    %v2824 = vpack.c.b16 %v2790, %v2789
    %v2825 = vpack.c.b16 %v2792, %v2791
    %v2826 = vpack.c.b16 %v2794, %v2793
    %2859 = vmatpush.bf16.msra.mxu0 %v2802
    %2860 = vmatpush.bf16.msra.mxu0 %v2801
    %2861 = vmatpush.bf16.msra.mxu0 %v2800
    %2862 = vmatpush.bf16.msra.mxu0 %v2799
    %2863 = vmatpush.bf16.msra.mxu0 %v2798
    %2864 = vmatpush.bf16.msra.mxu0 %v2797
    %2865 = vmatpush.bf16.msra.mxu0 %v2796
    %2866 = vmatpush.bf16.msra.mxu0 %v2795
    %2867 = vmatmul.bf16.gmra.mxu0 %v2595
    %v2868 = vpop.f32.mrf.mxu0
    %v2869 = vadd.f32 %v2665, %v2868
    %v2870 = vpop.f32.mrf.mxu0
    %2871 = vdwg.mxu0
    %2872 = vmatpush.bf16.msra.mxu0 %v2810
    %2873 = vmatpush.bf16.msra.mxu0 %v2809
    %2874 = vmatpush.bf16.msra.mxu0 %v2808
    %2875 = vmatpush.bf16.msra.mxu0 %v2807
    %2876 = vmatpush.bf16.msra.mxu0 %v2806
    %2877 = vmatpush.bf16.msra.mxu0 %v2805
    %2878 = vmatpush.bf16.msra.mxu0 %v2804
    %2879 = vmatpush.bf16.msra.mxu0 %v2803
    %2880 = vmatmul.bf16.gmra.mxu0 %v2596
    %v2881 = vpop.f32.mrf.mxu0
    %v2882 = vadd.f32 %v2869, %v2881
    %v2883 = vpop.f32.mrf.mxu0
    %2884 = vdwg.mxu0
    %2885 = vmatpush.bf16.msra.mxu0 %v2818
    %2886 = vmatpush.bf16.msra.mxu0 %v2817
    %2887 = vmatpush.bf16.msra.mxu0 %v2816
    %2888 = vmatpush.bf16.msra.mxu0 %v2815
    %2889 = vmatpush.bf16.msra.mxu0 %v2814
    %2890 = vmatpush.bf16.msra.mxu0 %v2813
    %2891 = vmatpush.bf16.msra.mxu0 %v2812
    %2892 = vmatpush.bf16.msra.mxu0 %v2811
    %2893 = vmatmul.bf16.gmra.mxu0 %v2597
    %v2894 = vpop.f32.mrf.mxu0
    %v2895 = vadd.f32 %v2882, %v2894
    %v2896 = vpop.f32.mrf.mxu0
    %2897 = vdwg.mxu0
    %2898 = vmatpush.bf16.msra.mxu0 %v2826
    %2899 = vmatpush.bf16.msra.mxu0 %v2825
    %2900 = vmatpush.bf16.msra.mxu0 %v2824
    %2901 = vmatpush.bf16.msra.mxu0 %v2823
    %2902 = vmatpush.bf16.msra.mxu0 %v2822
    %2903 = vmatpush.bf16.msra.mxu0 %v2821
    %2904 = vmatpush.bf16.msra.mxu0 %v2820
    %2905 = vmatpush.bf16.msra.mxu0 %v2819
    %2906 = vmatmul.bf16.gmra.mxu0 %v2598
    %v2907 = vpop.f32.mrf.mxu0
    %v2908 = vadd.f32 %v2895, %v2907
    %v2909 = vpop.f32.mrf.mxu0
    %2910 = vdwg.mxu0
    %2911 = vst [vmem:[%s9] sm:$0xff] %v2908
    // Predicated region
    $region50: #{discriminator_forward.1} parent=1 // pred_check
      _
    $region51: #{discriminator_forward.1} parent=1 // pred_check_branch
      %2913 = sbr.rel (0) target = $region53
    $region52: #{discriminator_forward.1} parent=1 // pred_region
      _
    $region53: #{discriminator_forward.1} parent=1 // pred_fallthru
      _
    // Predicated region
    $region54: #{discriminator_forward.1} parent=1 // pred_check
      _
    $region55: #{discriminator_forward.1} parent=1 // pred_check_branch
      %2915 = sbr.rel (0) target = $region57
    $region56: #{discriminator_forward.1} parent=1 // pred_region
      _
    $region57: #{discriminator_forward.1} parent=1 // pred_fallthru
      _
    %2916 = vsyncpa [#allocation3], 1
    %2917 = vsyncpa [#allocation5], 1

</llo_original>
